<compile_context>
chip_gen: v7x
topology: tpu7x:2x2x1
jax: 0.10.0
libtpu: 0.0.40
codegen_flags: <defaults>
</compile_context>

<pallas_src>
import random

import jax
import jax.numpy as jnp
from jax.experimental import pallas as pl
from jax.experimental.pallas import tpu as pltpu


# ------------------------------ fused kernel ------------------------------- #

def _seq2seq_kernel(flags_ref,                       # SMEM (T_trg,) int32
                    src_emb_ref, trg_emb_ref,        # VMEM (T,B_pad,E_pad) f32
                    enc_wih_ref, enc_whh_ref, enc_b_ref,
                    dec_wih_ref, dec_whh_ref, dec_b_ref,
                    fc_w_ref, fc_b_ref, dec_emb_ref,
                    out_ref,                         # VMEM (T_trg,B_pad,V_pad) f32
                    h_scr, c_scr, x_scr):            # VMEM scratch
    T_src = src_emb_ref.shape[0]
    T_trg = out_ref.shape[0]
    Hp = h_scr.shape[1]
    Vp = fc_w_ref.shape[1]

    h_scr[...] = jnp.zeros_like(h_scr)
    c_scr[...] = jnp.zeros_like(c_scr)

    def lstm_step(x, wih_ref, whh_ref, b_ref):
        """One LSTM cell step. PyTorch gate order i, f, g, o (bias = b_ih+b_hh)."""
        h = h_scr[...]
        c = c_scr[...]
        gates = (jnp.dot(x.astype(jnp.bfloat16), wih_ref[...],
                         preferred_element_type=jnp.float32)
                 + jnp.dot(h.astype(jnp.bfloat16), whh_ref[...],
                           preferred_element_type=jnp.float32)
                 + b_ref[...])                                  # (B_pad, 4*Hp)
        i_g = jax.nn.sigmoid(gates[:, 0 * Hp:1 * Hp])
        f_g = jax.nn.sigmoid(gates[:, 1 * Hp:2 * Hp])
        g_g = jnp.tanh(gates[:, 2 * Hp:3 * Hp])
        o_g = jax.nn.sigmoid(gates[:, 3 * Hp:4 * Hp])
        c_new = f_g * c + i_g * g_g
        h_new = o_g * jnp.tanh(c_new)
        h_scr[...] = h_new
        c_scr[...] = c_new
        return h_new

    # ---------------- encoder: run over src, keep final h/c ---------------- #
    def enc_body(t, carry):
        lstm_step(src_emb_ref[t], enc_wih_ref, enc_whh_ref, enc_b_ref)
        return carry

    jax.lax.fori_loop(0, T_src, enc_body, 0)

    # ---------------- decoder: step-by-step with teacher forcing ----------- #
    out_ref[0] = jnp.zeros(out_ref.shape[1:], out_ref.dtype)   # outputs[0] = 0
    x_scr[...] = trg_emb_ref[0]                                # input = emb(trg[0])

    def dec_body(t, carry):
        h_new = lstm_step(x_scr[...], dec_wih_ref, dec_whh_ref, dec_b_ref)
        logits = (jnp.dot(h_new.astype(jnp.bfloat16), fc_w_ref[...],
                          preferred_element_type=jnp.float32)
                  + fc_b_ref[...])                              # (B_pad, Vp)
        out_ref[t] = logits

        # greedy argmax (first-occurrence tie-break) -> one-hot -> embedding,
        # all on-chip so the next step never leaves the kernel.
        lane = jax.lax.broadcasted_iota(jnp.int32, logits.shape, 1)
        mx = jnp.max(logits, axis=-1, keepdims=True)
        idx = jnp.min(jnp.where(logits == mx, lane, Vp), axis=-1, keepdims=True)
        onehot = (lane == idx).astype(jnp.float32)              # (B_pad, Vp)
        top1_emb = jnp.dot(onehot, dec_emb_ref[...],
                           preferred_element_type=jnp.float32)  # (B_pad, E_pad)

        # teacher forcing: scalar blend (flag is 0/1 int32 read from SMEM)
        w_tf = (flags_ref[t] > 0).astype(jnp.float32)
        x_scr[...] = w_tf * trg_emb_ref[t] + (1.0 - w_tf) * top1_emb
        return carry

    jax.lax.fori_loop(1, T_trg, dec_body, 0)


# ------------------------------ model forward ------------------------------ #

def init_params(key, src_vocab, trg_vocab, emb_dim, hid_dim):
    ks = jax.random.split(key, 10)
    s = 0.1
    return {
        "enc_emb": s * jax.random.normal(ks[0], (src_vocab, emb_dim), jnp.float32),
        "enc_wih": s * jax.random.normal(ks[1], (emb_dim, 4 * hid_dim), jnp.float32),
        "enc_whh": s * jax.random.normal(ks[2], (hid_dim, 4 * hid_dim), jnp.float32),
        "enc_b":   s * jax.random.normal(ks[3], (1, 4 * hid_dim), jnp.float32),
        "dec_emb": s * jax.random.normal(ks[4], (trg_vocab, emb_dim), jnp.float32),
        "dec_wih": s * jax.random.normal(ks[5], (emb_dim, 4 * hid_dim), jnp.float32),
        "dec_whh": s * jax.random.normal(ks[6], (hid_dim, 4 * hid_dim), jnp.float32),
        "dec_b":   s * jax.random.normal(ks[7], (1, 4 * hid_dim), jnp.float32),
        "fc_w":    s * jax.random.normal(ks[8], (hid_dim, trg_vocab), jnp.float32),
        "fc_b":    s * jax.random.normal(ks[9], (1, trg_vocab), jnp.float32),
    }


def _round_up(x, m):
    return ((x + m - 1) // m) * m


@jax.jit
def seq2seq_forward(params, src, trg, tf_flags):
    """src:(T_src,B) int32, trg:(T_trg,B) int32, tf_flags:(T_trg,) int32
    -> outputs (T_trg, B, V) float32 (outputs[0] is zeros, like PyTorch)."""
    T_src, B = src.shape
    T_trg = trg.shape[0]
    E = params["enc_emb"].shape[1]
    H = params["enc_whh"].shape[0]
    V = params["fc_w"].shape[1]

    B_pad = _round_up(max(B, 8), 8)          # full sublanes
    E_pad = _round_up(max(E, 128), 128)      # lane-dense
    H_pad = _round_up(max(H, 128), 128)
    V_pad = _round_up(max(V, 128), 128)

    bf16 = jnp.bfloat16

    # --- pad weights (per-gate slabs placed at 128-lane aligned offsets) --- #
    def pad_gate_w(w, in_dim_pad):
        in_dim = w.shape[0]
        w4 = w.reshape(in_dim, 4, H)
        w4 = jnp.pad(w4, ((0, in_dim_pad - in_dim), (0, 0), (0, H_pad - H)))
        return w4.reshape(in_dim_pad, 4 * H_pad).astype(bf16)

    def pad_gate_b(b):
        # NOTE: single bias == PyTorch's (b_ih + b_hh); pre-broadcast to B_pad
        # once so no per-step broadcast happens inside the fused loop.
        b4 = jnp.pad(b.reshape(4, H), ((0, 0), (0, H_pad - H)))
        return jnp.broadcast_to(b4.reshape(1, 4 * H_pad), (B_pad, 4 * H_pad))

    enc_wih = pad_gate_w(params["enc_wih"], E_pad)
    enc_whh = pad_gate_w(params["enc_whh"], H_pad)
    enc_b = pad_gate_b(params["enc_b"])
    dec_wih = pad_gate_w(params["dec_wih"], E_pad)
    dec_whh = pad_gate_w(params["dec_whh"], H_pad)
    dec_b = pad_gate_b(params["dec_b"])

    fc_w = jnp.pad(params["fc_w"], ((0, H_pad - H), (0, V_pad - V))).astype(bf16)
    # padded vocab lanes get a huge negative bias so argmax never selects them
    fc_b = jnp.pad(params["fc_b"], ((0, 0), (0, V_pad - V)),
                   constant_values=-1e30)
    fc_b = jnp.broadcast_to(fc_b, (B_pad, V_pad))

    dec_emb = jnp.pad(params["dec_emb"], ((0, V_pad - V), (0, E_pad - E)))

    # --- embedding lookups (cheap XLA gathers), padded for the kernel ------ #
    # TODO(synk): training-time embedding dropout from the PyTorch model is omitted.
    src_emb = jnp.take(params["enc_emb"], src, axis=0)          # (T_src, B, E)
    src_emb = jnp.pad(src_emb, ((0, 0), (0, B_pad - B), (0, E_pad - E)))
    trg_emb = jnp.take(params["dec_emb"], trg, axis=0)          # (T_trg, B, E)
    trg_emb = jnp.pad(trg_emb, ((0, 0), (0, B_pad - B), (0, E_pad - E)))

    flags = tf_flags.astype(jnp.int32)

    vmem = pl.BlockSpec(memory_space=pltpu.MemorySpace.VMEM)
    smem = pl.BlockSpec(memory_space=pltpu.MemorySpace.SMEM)

    out = pl.pallas_call(
        _seq2seq_kernel,
        out_shape=jax.ShapeDtypeStruct((T_trg, B_pad, V_pad), jnp.float32),
        in_specs=[smem] + [vmem] * 11,
        out_specs=vmem,
        scratch_shapes=[pltpu.VMEM((B_pad, H_pad), jnp.float32),   # h
                        pltpu.VMEM((B_pad, H_pad), jnp.float32),   # c
                        pltpu.VMEM((B_pad, E_pad), jnp.float32)],  # next input emb
    )(flags, src_emb, trg_emb,
      enc_wih, enc_whh, enc_b,
      dec_wih, dec_whh, dec_b,
      fc_w, fc_b, dec_emb)

    return out[:, :B, :V]


# ----------------------------------- main ----------------------------------- #

if __name__ == "__main__":
    SRC_VOCAB = 50
    TRG_VOCAB = 64
    EMB_DIM = 32
    HID_DIM = 32
    BATCH = 4
    SRC_LEN = 6
    TRG_LEN = 8
    TEACHER_FORCING_RATIO = 0.5

    key = jax.random.PRNGKey(0)
    k_par, k_src, k_trg = jax.random.split(key, 3)

    params = init_params(k_par, SRC_VOCAB, TRG_VOCAB, EMB_DIM, HID_DIM)
    src = jax.random.randint(k_src, (SRC_LEN, BATCH), 0, SRC_VOCAB, dtype=jnp.int32)
    trg = jax.random.randint(k_trg, (TRG_LEN, BATCH), 0, TRG_VOCAB, dtype=jnp.int32)

    # Deterministic teacher-forcing decisions (stand-in for random.random()),
    # passed as device data so any flag pattern reuses the same traced program.
    random.seed(0)
    tf_flags = jnp.array(
        [1 if random.random() < TEACHER_FORCING_RATIO else 0 for _ in range(TRG_LEN)],
        dtype=jnp.int32)

    outputs = seq2seq_forward(params, src, trg, tf_flags)
    outputs = jax.block_until_ready(outputs)

    assert outputs.shape == (TRG_LEN, BATCH, TRG_VOCAB)
    assert outputs.dtype == jnp.float32
    assert bool(jnp.all(jnp.isfinite(outputs)))
    print("KERNEL_OK")
</pallas_src>

<mosaic_0001>
module attributes {stable_mosaic.version = 11 : i64} {
  func.func @_seq2seq_kernel(%arg0: memref<8xi32, #tpu.memory_space<smem>>, %arg1: memref<6x8x128xf32, #tpu.memory_space<vmem>>, %arg2: memref<8x8x128xf32, #tpu.memory_space<vmem>>, %arg3: memref<128x512xbf16, #tpu.memory_space<vmem>>, %arg4: memref<128x512xbf16, #tpu.memory_space<vmem>>, %arg5: memref<8x512xf32, #tpu.memory_space<vmem>>, %arg6: memref<128x512xbf16, #tpu.memory_space<vmem>>, %arg7: memref<128x512xbf16, #tpu.memory_space<vmem>>, %arg8: memref<8x512xf32, #tpu.memory_space<vmem>>, %arg9: memref<128x128xbf16, #tpu.memory_space<vmem>>, %arg10: memref<8x128xf32, #tpu.memory_space<vmem>>, %arg11: memref<128x128xf32, #tpu.memory_space<vmem>>, %arg12: memref<8x8x128xf32, #tpu.memory_space<vmem>>, %arg13: memref<8x128xf32, #tpu.memory_space<vmem>>, %arg14: memref<8x128xf32, #tpu.memory_space<vmem>>, %arg15: memref<8x128xf32, #tpu.memory_space<vmem>>) attributes {dimension_semantics = [], scalar_prefetch = 0 : i64, scratch_operands = 3 : i64, tpu.core_type = #tpu.core_type<tc>} {
    %cst = arith.constant 0.000000e+00 : f32
    %0 = vector.broadcast %cst : f32 to vector<8x128xf32>
    %c0 = arith.constant 0 : index
    %c0_0 = arith.constant 0 : index
    %1 = vector.load %arg13[%c0, %c0_0] : memref<8x128xf32, #tpu.memory_space<vmem>>, vector<8x128xf32>
    tpu.vector_store %arg13[%c0, %c0_0], %0 {strides = array<i32>} : memref<8x128xf32, #tpu.memory_space<vmem>>, vector<8x128xf32>,
    %cst_1 = arith.constant 0.000000e+00 : f32
    %2 = vector.broadcast %cst_1 : f32 to vector<8x128xf32>
    %c0_2 = arith.constant 0 : index
    %c0_3 = arith.constant 0 : index
    %3 = vector.load %arg14[%c0_2, %c0_3] : memref<8x128xf32, #tpu.memory_space<vmem>>, vector<8x128xf32>
    tpu.vector_store %arg14[%c0_2, %c0_3], %2 {strides = array<i32>} : memref<8x128xf32, #tpu.memory_space<vmem>>, vector<8x128xf32>,
    %c0_i32 = arith.constant 0 : i32
    %c6_i32 = arith.constant 6 : i32
    %4 = arith.addi %c0_i32, %c6_i32 : i32
    %c1_i32 = arith.constant 1 : i32
    scf.for %arg16 = %c0_i32 to %4 step %c1_i32  : i32 {
      %13 = arith.index_cast %arg16 : i32 to index
      %c0_17 = arith.constant 0 : index
      %c0_18 = arith.constant 0 : index
      %14 = vector.load %arg1[%13, %c0_17, %c0_18] : memref<6x8x128xf32, #tpu.memory_space<vmem>>, vector<1x8x128xf32>
      %15 = vector.shape_cast %14 : vector<1x8x128xf32> to vector<8x128xf32>
      %c0_19 = arith.constant 0 : index
      %c0_20 = arith.constant 0 : index
      %16 = vector.load %arg13[%c0_19, %c0_20] : memref<8x128xf32, #tpu.memory_space<vmem>>, vector<8x128xf32>
      %c0_21 = arith.constant 0 : index
      %c0_22 = arith.constant 0 : index
      %17 = vector.load %arg14[%c0_21, %c0_22] : memref<8x128xf32, #tpu.memory_space<vmem>>, vector<8x128xf32>
      %18 = arith.truncf %15 : vector<8x128xf32> to vector<8x128xbf16>
      %c0_23 = arith.constant 0 : index
      %c0_24 = arith.constant 0 : index
      %19 = vector.load %arg3[%c0_23, %c0_24] : memref<128x512xbf16, #tpu.memory_space<vmem>>, vector<128x512xbf16>
      %cst_25 = arith.constant dense<0.000000e+00> : vector<8x512xf32>
      %20 = tpu.matmul %18, %19, %cst_25 {dimension_numbers = #tpu.dot_dimension_numbers<[1], [0], [0], [1], [0, 0, 1, 1], [], []>} : vector<8x128xbf16>, vector<128x512xbf16>, vector<8x512xf32> -> vector<8x512xf32>
      %21 = arith.truncf %16 : vector<8x128xf32> to vector<8x128xbf16>
      %c0_26 = arith.constant 0 : index
      %c0_27 = arith.constant 0 : index
      %22 = vector.load %arg4[%c0_26, %c0_27] : memref<128x512xbf16, #tpu.memory_space<vmem>>, vector<128x512xbf16>
      %cst_28 = arith.constant dense<0.000000e+00> : vector<8x512xf32>
      %23 = tpu.matmul %21, %22, %cst_28 {dimension_numbers = #tpu.dot_dimension_numbers<[1], [0], [0], [1], [0, 0, 1, 1], [], []>} : vector<8x128xbf16>, vector<128x512xbf16>, vector<8x512xf32> -> vector<8x512xf32>
      %24 = arith.addf %20, %23 : vector<8x512xf32>
      %c0_29 = arith.constant 0 : index
      %c0_30 = arith.constant 0 : index
      %25 = vector.load %arg5[%c0_29, %c0_30] : memref<8x512xf32, #tpu.memory_space<vmem>>, vector<8x512xf32>
      %26 = arith.addf %24, %25 : vector<8x512xf32>
      %27 = vector.extract_strided_slice %26 {offsets = [0, 0], sizes = [8, 128], strides = [1, 1]} : vector<8x512xf32> to vector<8x128xf32>
      %28 = arith.negf %27 : vector<8x128xf32>
      %29 = math.exp %28 : vector<8x128xf32>
      %cst_31 = arith.constant 1.000000e+00 : f32
      %30 = vector.broadcast %cst_31 : f32 to vector<8x128xf32>
      %31 = arith.addf %30, %29 : vector<8x128xf32>
      %32 = arith.divf %30, %31 : vector<8x128xf32>
      %33 = vector.extract_strided_slice %26 {offsets = [0, 128], sizes = [8, 128], strides = [1, 1]} : vector<8x512xf32> to vector<8x128xf32>
      %34 = arith.negf %33 : vector<8x128xf32>
      %35 = math.exp %34 : vector<8x128xf32>
      %cst_32 = arith.constant 1.000000e+00 : f32
      %36 = vector.broadcast %cst_32 : f32 to vector<8x128xf32>
      %37 = arith.addf %36, %35 : vector<8x128xf32>
      %38 = arith.divf %36, %37 : vector<8x128xf32>
      %39 = vector.extract_strided_slice %26 {offsets = [0, 256], sizes = [8, 128], strides = [1, 1]} : vector<8x512xf32> to vector<8x128xf32>
      %40 = math.tanh %39 : vector<8x128xf32>
      %41 = vector.extract_strided_slice %26 {offsets = [0, 384], sizes = [8, 128], strides = [1, 1]} : vector<8x512xf32> to vector<8x128xf32>
      %42 = arith.negf %41 : vector<8x128xf32>
      %43 = math.exp %42 : vector<8x128xf32>
      %cst_33 = arith.constant 1.000000e+00 : f32
      %44 = vector.broadcast %cst_33 : f32 to vector<8x128xf32>
      %45 = arith.addf %44, %43 : vector<8x128xf32>
      %46 = arith.divf %44, %45 : vector<8x128xf32>
      %47 = arith.mulf %38, %17 : vector<8x128xf32>
      %48 = arith.mulf %32, %40 : vector<8x128xf32>
      %49 = arith.addf %47, %48 : vector<8x128xf32>
      %50 = math.tanh %49 : vector<8x128xf32>
      %51 = arith.mulf %46, %50 : vector<8x128xf32>
      %c0_34 = arith.constant 0 : index
      %c0_35 = arith.constant 0 : index
      %52 = vector.load %arg13[%c0_34, %c0_35] : memref<8x128xf32, #tpu.memory_space<vmem>>, vector<8x128xf32>
      tpu.vector_store %arg13[%c0_34, %c0_35], %51 {strides = array<i32>} : memref<8x128xf32, #tpu.memory_space<vmem>>, vector<8x128xf32>,
      %c0_36 = arith.constant 0 : index
      %c0_37 = arith.constant 0 : index
      %53 = vector.load %arg14[%c0_36, %c0_37] : memref<8x128xf32, #tpu.memory_space<vmem>>, vector<8x128xf32>
      tpu.vector_store %arg14[%c0_36, %c0_37], %49 {strides = array<i32>} : memref<8x128xf32, #tpu.memory_space<vmem>>, vector<8x128xf32>,
    }
    %c6_i32_4 = arith.constant 6 : i32
    %cst_5 = arith.constant 0.000000e+00 : f32
    %5 = vector.broadcast %cst_5 : f32 to vector<8x128xf32>
    %c0_6 = arith.constant 0 : index
    %c0_7 = arith.constant 0 : index
    %c0_8 = arith.constant 0 : index
    %6 = vector.load %arg12[%c0_6, %c0_7, %c0_8] : memref<8x8x128xf32, #tpu.memory_space<vmem>>, vector<1x8x128xf32>
    %7 = vector.shape_cast %6 : vector<1x8x128xf32> to vector<8x128xf32>
    %8 = vector.shape_cast %5 : vector<8x128xf32> to vector<1x8x128xf32>
    tpu.vector_store %arg12[%c0_6, %c0_7, %c0_8], %8 {strides = array<i32>} : memref<8x8x128xf32, #tpu.memory_space<vmem>>, vector<1x8x128xf32>,
    %c0_9 = arith.constant 0 : index
    %c0_10 = arith.constant 0 : index
    %c0_11 = arith.constant 0 : index
    %9 = vector.load %arg2[%c0_9, %c0_10, %c0_11] : memref<8x8x128xf32, #tpu.memory_space<vmem>>, vector<1x8x128xf32>
    %10 = vector.shape_cast %9 : vector<1x8x128xf32> to vector<8x128xf32>
    %c0_12 = arith.constant 0 : index
    %c0_13 = arith.constant 0 : index
    %11 = vector.load %arg15[%c0_12, %c0_13] : memref<8x128xf32, #tpu.memory_space<vmem>>, vector<8x128xf32>
    tpu.vector_store %arg15[%c0_12, %c0_13], %10 {strides = array<i32>} : memref<8x128xf32, #tpu.memory_space<vmem>>, vector<8x128xf32>,
    %c1_i32_14 = arith.constant 1 : i32
    %c7_i32 = arith.constant 7 : i32
    %12 = arith.addi %c1_i32_14, %c7_i32 : i32
    %c1_i32_15 = arith.constant 1 : i32
    scf.for %arg16 = %c1_i32_14 to %12 step %c1_i32_15  : i32 {
      %c0_17 = arith.constant 0 : index
      %c0_18 = arith.constant 0 : index
      %13 = vector.load %arg15[%c0_17, %c0_18] : memref<8x128xf32, #tpu.memory_space<vmem>>, vector<8x128xf32>
      %c0_19 = arith.constant 0 : index
      %c0_20 = arith.constant 0 : index
      %14 = vector.load %arg13[%c0_19, %c0_20] : memref<8x128xf32, #tpu.memory_space<vmem>>, vector<8x128xf32>
      %c0_21 = arith.constant 0 : index
      %c0_22 = arith.constant 0 : index
      %15 = vector.load %arg14[%c0_21, %c0_22] : memref<8x128xf32, #tpu.memory_space<vmem>>, vector<8x128xf32>
      %16 = arith.truncf %13 : vector<8x128xf32> to vector<8x128xbf16>
      %c0_23 = arith.constant 0 : index
      %c0_24 = arith.constant 0 : index
      %17 = vector.load %arg6[%c0_23, %c0_24] : memref<128x512xbf16, #tpu.memory_space<vmem>>, vector<128x512xbf16>
      %cst_25 = arith.constant dense<0.000000e+00> : vector<8x512xf32>
      %18 = tpu.matmul %16, %17, %cst_25 {dimension_numbers = #tpu.dot_dimension_numbers<[1], [0], [0], [1], [0, 0, 1, 1], [], []>} : vector<8x128xbf16>, vector<128x512xbf16>, vector<8x512xf32> -> vector<8x512xf32>
      %19 = arith.truncf %14 : vector<8x128xf32> to vector<8x128xbf16>
      %c0_26 = arith.constant 0 : index
      %c0_27 = arith.constant 0 : index
      %20 = vector.load %arg7[%c0_26, %c0_27] : memref<128x512xbf16, #tpu.memory_space<vmem>>, vector<128x512xbf16>
      %cst_28 = arith.constant dense<0.000000e+00> : vector<8x512xf32>
      %21 = tpu.matmul %19, %20, %cst_28 {dimension_numbers = #tpu.dot_dimension_numbers<[1], [0], [0], [1], [0, 0, 1, 1], [], []>} : vector<8x128xbf16>, vector<128x512xbf16>, vector<8x512xf32> -> vector<8x512xf32>
      %22 = arith.addf %18, %21 : vector<8x512xf32>
      %c0_29 = arith.constant 0 : index
      %c0_30 = arith.constant 0 : index
      %23 = vector.load %arg8[%c0_29, %c0_30] : memref<8x512xf32, #tpu.memory_space<vmem>>, vector<8x512xf32>
      %24 = arith.addf %22, %23 : vector<8x512xf32>
      %25 = vector.extract_strided_slice %24 {offsets = [0, 0], sizes = [8, 128], strides = [1, 1]} : vector<8x512xf32> to vector<8x128xf32>
      %26 = arith.negf %25 : vector<8x128xf32>
      %27 = math.exp %26 : vector<8x128xf32>
      %cst_31 = arith.constant 1.000000e+00 : f32
      %28 = vector.broadcast %cst_31 : f32 to vector<8x128xf32>
      %29 = arith.addf %28, %27 : vector<8x128xf32>
      %30 = arith.divf %28, %29 : vector<8x128xf32>
      %31 = vector.extract_strided_slice %24 {offsets = [0, 128], sizes = [8, 128], strides = [1, 1]} : vector<8x512xf32> to vector<8x128xf32>
      %32 = arith.negf %31 : vector<8x128xf32>
      %33 = math.exp %32 : vector<8x128xf32>
      %cst_32 = arith.constant 1.000000e+00 : f32
      %34 = vector.broadcast %cst_32 : f32 to vector<8x128xf32>
      %35 = arith.addf %34, %33 : vector<8x128xf32>
      %36 = arith.divf %34, %35 : vector<8x128xf32>
      %37 = vector.extract_strided_slice %24 {offsets = [0, 256], sizes = [8, 128], strides = [1, 1]} : vector<8x512xf32> to vector<8x128xf32>
      %38 = math.tanh %37 : vector<8x128xf32>
      %39 = vector.extract_strided_slice %24 {offsets = [0, 384], sizes = [8, 128], strides = [1, 1]} : vector<8x512xf32> to vector<8x128xf32>
      %40 = arith.negf %39 : vector<8x128xf32>
      %41 = math.exp %40 : vector<8x128xf32>
      %cst_33 = arith.constant 1.000000e+00 : f32
      %42 = vector.broadcast %cst_33 : f32 to vector<8x128xf32>
      %43 = arith.addf %42, %41 : vector<8x128xf32>
      %44 = arith.divf %42, %43 : vector<8x128xf32>
      %45 = arith.mulf %36, %15 : vector<8x128xf32>
      %46 = arith.mulf %30, %38 : vector<8x128xf32>
      %47 = arith.addf %45, %46 : vector<8x128xf32>
      %48 = math.tanh %47 : vector<8x128xf32>
      %49 = arith.mulf %44, %48 : vector<8x128xf32>
      %c0_34 = arith.constant 0 : index
      %c0_35 = arith.constant 0 : index
      %50 = vector.load %arg13[%c0_34, %c0_35] : memref<8x128xf32, #tpu.memory_space<vmem>>, vector<8x128xf32>
      tpu.vector_store %arg13[%c0_34, %c0_35], %49 {strides = array<i32>} : memref<8x128xf32, #tpu.memory_space<vmem>>, vector<8x128xf32>,
      %c0_36 = arith.constant 0 : index
      %c0_37 = arith.constant 0 : index
      %51 = vector.load %arg14[%c0_36, %c0_37] : memref<8x128xf32, #tpu.memory_space<vmem>>, vector<8x128xf32>
      tpu.vector_store %arg14[%c0_36, %c0_37], %47 {strides = array<i32>} : memref<8x128xf32, #tpu.memory_space<vmem>>, vector<8x128xf32>,
      %52 = arith.truncf %49 : vector<8x128xf32> to vector<8x128xbf16>
      %c0_38 = arith.constant 0 : index
      %c0_39 = arith.constant 0 : index
      %53 = vector.load %arg9[%c0_38, %c0_39] : memref<128x128xbf16, #tpu.memory_space<vmem>>, vector<128x128xbf16>
      %cst_40 = arith.constant dense<0.000000e+00> : vector<8x128xf32>
      %54 = tpu.matmul %52, %53, %cst_40 {dimension_numbers = #tpu.dot_dimension_numbers<[1], [0], [0], [1], [0, 0, 1, 1], [], []>} : vector<8x128xbf16>, vector<128x128xbf16>, vector<8x128xf32> -> vector<8x128xf32>
      %c0_41 = arith.constant 0 : index
      %c0_42 = arith.constant 0 : index
      %55 = vector.load %arg10[%c0_41, %c0_42] : memref<8x128xf32, #tpu.memory_space<vmem>>, vector<8x128xf32>
      %56 = arith.addf %54, %55 : vector<8x128xf32>
      %57 = arith.index_cast %arg16 : i32 to index
      %c0_43 = arith.constant 0 : index
      %c0_44 = arith.constant 0 : index
      %58 = vector.load %arg12[%57, %c0_43, %c0_44] : memref<8x8x128xf32, #tpu.memory_space<vmem>>, vector<1x8x128xf32>
      %59 = vector.shape_cast %58 : vector<1x8x128xf32> to vector<8x128xf32>
      %60 = vector.shape_cast %56 : vector<8x128xf32> to vector<1x8x128xf32>
      tpu.vector_store %arg12[%57, %c0_43, %c0_44], %60 {strides = array<i32>} : memref<8x8x128xf32, #tpu.memory_space<vmem>>, vector<1x8x128xf32>,
      %61 = tpu.iota {dimensions = array<i32: 1>} : vector<8x128xi32>
      %cst_45 = arith.constant dense<0xFF800000> : vector<8xf32>
      %62 = vector.multi_reduction <maximumf>, %56, %cst_45 [1] : vector<8x128xf32> to vector<8xf32>
      %63 = vector.shape_cast %62 : vector<8xf32> to vector<8x1xf32>
      %64 = vector.broadcast %63 : vector<8x1xf32> to vector<8x128xf32>
      %65 = arith.cmpf oeq, %56, %64 : vector<8x128xf32>
      %c128_i32 = arith.constant 128 : i32
      %66 = vector.broadcast %c128_i32 : i32 to vector<8x128xi32>
      %67 = arith.select %65, %61, %66 : vector<8x128xi1>, vector<8x128xi32>
      %cst_46 = arith.constant dense<2147483647> : vector<8xi32>
      %68 = vector.multi_reduction <minsi>, %67, %cst_46 [1] : vector<8x128xi32> to vector<8xi32>
      %69 = vector.shape_cast %68 : vector<8xi32> to vector<8x1xi32>
      %70 = vector.broadcast %69 : vector<8x1xi32> to vector<8x128xi32>
      %71 = arith.cmpi eq, %61, %70 : vector<8x128xi32>
      %72 = arith.extui %71 : vector<8x128xi1> to vector<8x128xi32>
      %73 = arith.sitofp %72 : vector<8x128xi32> to vector<8x128xf32>
      %c0_47 = arith.constant 0 : index
      %c0_48 = arith.constant 0 : index
      %74 = vector.load %arg11[%c0_47, %c0_48] : memref<128x128xf32, #tpu.memory_space<vmem>>, vector<128x128xf32>
      %cst_49 = arith.constant dense<0.000000e+00> : vector<8x128xf32>
      %75 = tpu.matmul %73, %74, %cst_49 {dimension_numbers = #tpu.dot_dimension_numbers<[1], [0], [0], [1], [0, 0, 1, 1], [], []>} : vector<8x128xf32>, vector<128x128xf32>, vector<8x128xf32> -> vector<8x128xf32>
      %76 = arith.index_cast %arg16 : i32 to index
      %77 = memref.load %arg0[%76] : memref<8xi32, #tpu.memory_space<smem>>
      %c0_i32_50 = arith.constant 0 : i32
      %78 = arith.cmpi sgt, %77, %c0_i32_50 : i32
      %79 = arith.extui %78 : i1 to i32
      %80 = arith.sitofp %79 : i32 to f32
      %81 = arith.index_cast %arg16 : i32 to index
      %c0_51 = arith.constant 0 : index
      %c0_52 = arith.constant 0 : index
      %82 = vector.load %arg2[%81, %c0_51, %c0_52] : memref<8x8x128xf32, #tpu.memory_space<vmem>>, vector<1x8x128xf32>
      %83 = vector.shape_cast %82 : vector<1x8x128xf32> to vector<8x128xf32>
      %84 = vector.broadcast %80 : f32 to vector<8x128xf32>
      %85 = arith.mulf %84, %83 : vector<8x128xf32>
      %cst_53 = arith.constant 1.000000e+00 : f32
      %86 = arith.subf %cst_53, %80 : f32
      %87 = vector.broadcast %86 : f32 to vector<8x128xf32>
      %88 = arith.mulf %87, %75 : vector<8x128xf32>
      %89 = arith.addf %85, %88 : vector<8x128xf32>
      %c0_54 = arith.constant 0 : index
      %c0_55 = arith.constant 0 : index
      %90 = vector.load %arg15[%c0_54, %c0_55] : memref<8x128xf32, #tpu.memory_space<vmem>>, vector<8x128xf32>
      tpu.vector_store %arg15[%c0_54, %c0_55], %89 {strides = array<i32>} : memref<8x128xf32, #tpu.memory_space<vmem>>, vector<8x128xf32>,
    }
    %c7_i32_16 = arith.constant 7 : i32
    return
  }
}

</mosaic_0001>

<llo_original>
// kernel: seq2seq_forward.1
$region0: #{seq2seq_forward.1}
  #allocation0 [shape = 'u32[]', space=smem, size = 0x4, offset = 0x4, fixed_abs, tag = 'smem constant byte address 0x4 - core index']
  #allocation1 [shape = 'u32[144,128]{1,0:T(1,128)}', space=vmem, size = 0x12000, scoped, tag = 'internal scratch']
  #allocation2 [shape = 'f32[8,128]{1,0:T(8,128)}', space=vmem, size = 0x1000, scoped, tag = 'scratch operand']
  #allocation3 [shape = 'f32[8,128]{1,0:T(8,128)}', space=vmem, size = 0x1000, scoped, tag = 'scratch operand']
  #allocation4 [shape = 'f32[8,128]{1,0:T(8,128)}', space=vmem, size = 0x1000, scoped, tag = 'scratch operand']
  %s0 = inlined_call_operand.vmem [shape: s32[8], index: 0, kind: input, shape index: {}]
  %s1 = inlined_call_operand.vmem [shape: f32[6,8,128], index: 1, kind: input, shape index: {}]
  %s2 = inlined_call_operand.vmem [shape: f32[8,8,128], index: 2, kind: input, shape index: {}]
  %s3 = inlined_call_operand.vmem [shape: bf16[128,512], index: 3, kind: input, shape index: {}]
  %s4 = inlined_call_operand.vmem [shape: bf16[128,512], index: 4, kind: input, shape index: {}]
  %s5 = inlined_call_operand.vmem [shape: f32[8,512], index: 5, kind: input, shape index: {}]
  %s6 = inlined_call_operand.vmem [shape: bf16[128,512], index: 6, kind: input, shape index: {}]
  %s7 = inlined_call_operand.vmem [shape: bf16[128,512], index: 7, kind: input, shape index: {}]
  %s8 = inlined_call_operand.vmem [shape: f32[8,512], index: 8, kind: input, shape index: {}]
  %s9 = inlined_call_operand.vmem [shape: bf16[128,128], index: 9, kind: input, shape index: {}]
  %s10 = inlined_call_operand.vmem [shape: f32[8,128], index: 10, kind: input, shape index: {}]
  %s11 = inlined_call_operand.vmem [shape: f32[128,128], index: 11, kind: input, shape index: {}]
  %s12 = inlined_call_operand.vmem [shape: f32[8,8,128], index: 12, kind: output, shape index: {}]
  %s13 = sld [smem:[#allocation0]]
  $region76: #{seq2seq_forward.1} parent=0
    _
  %s15 = ssub.s32 1, %s13
  %s16 = scalar_select 0, %s15, %s13
  $region1: #{seq2seq_forward.1} parent=0
    #allocation5 [shape = 'u8[512]{0}', space=smem, size = 0x200, scoped, tag = 'input window, operand 0, single buffered']
    #allocation6 [shape = 's32[1]{0}', space=sflag, size = 0x4, scoped, tag = 'scoped memory for seq2seq_forward.1']
    %17 = vsyncpa [#allocation6], 0
    // Predicated region
    $region2: #{seq2seq_forward.1} parent=1 // pred_check
      _
    $region3: #{seq2seq_forward.1} parent=1 // pred_check_branch
      %19 = sbr.rel (0) target = $region5
    $region4: #{seq2seq_forward.1} parent=1 // pred_region
      %s21 = ssub.s32 16, 16
      %22 = vsyncadd [#allocation6], %s21
      %s24 = sshll.u32 %s0, 4
      %s25 = int_to_ptr.vmem [resolvable:$true] %s24
      %27 = dma.vmem_to_smem %s25, 16, [#allocation5], [#allocation6]
    $region5: #{seq2seq_forward.1} parent=1 // pred_fallthru
      _
    // Predicated region
    $region6: #{seq2seq_forward.1} parent=1 // pred_check
      _
    $region7: #{seq2seq_forward.1} parent=1 // pred_check_branch
      %29 = sbr.rel (0) target = $region9
    $region8: #{seq2seq_forward.1} parent=1 // pred_region
      _
    $region9: #{seq2seq_forward.1} parent=1 // pred_fallthru
      _
    // Predicated region
    $region10: #{seq2seq_forward.1} parent=1 // pred_check
      _
    $region11: #{seq2seq_forward.1} parent=1 // pred_check_branch
      %31 = sbr.rel (0) target = $region13
    $region12: #{seq2seq_forward.1} parent=1 // pred_region
      _
    $region13: #{seq2seq_forward.1} parent=1 // pred_fallthru
      _
    // Predicated region
    $region14: #{seq2seq_forward.1} parent=1 // pred_check
      _
    $region15: #{seq2seq_forward.1} parent=1 // pred_check_branch
      %33 = sbr.rel (0) target = $region17
    $region16: #{seq2seq_forward.1} parent=1 // pred_region
      _
    $region17: #{seq2seq_forward.1} parent=1 // pred_fallthru
      _
    // Predicated region
    $region18: #{seq2seq_forward.1} parent=1 // pred_check
      _
    $region19: #{seq2seq_forward.1} parent=1 // pred_check_branch
      %35 = sbr.rel (0) target = $region21
    $region20: #{seq2seq_forward.1} parent=1 // pred_region
      _
    $region21: #{seq2seq_forward.1} parent=1 // pred_fallthru
      _
    // Predicated region
    $region22: #{seq2seq_forward.1} parent=1 // pred_check
      _
    $region23: #{seq2seq_forward.1} parent=1 // pred_check_branch
      %37 = sbr.rel (0) target = $region25
    $region24: #{seq2seq_forward.1} parent=1 // pred_region
      _
    $region25: #{seq2seq_forward.1} parent=1 // pred_fallthru
      _
    // Predicated region
    $region26: #{seq2seq_forward.1} parent=1 // pred_check
      _
    $region27: #{seq2seq_forward.1} parent=1 // pred_check_branch
      %39 = sbr.rel (0) target = $region29
    $region28: #{seq2seq_forward.1} parent=1 // pred_region
      _
    $region29: #{seq2seq_forward.1} parent=1 // pred_fallthru
      _
    // Predicated region
    $region30: #{seq2seq_forward.1} parent=1 // pred_check
      _
    $region31: #{seq2seq_forward.1} parent=1 // pred_check_branch
      %41 = sbr.rel (0) target = $region33
    $region32: #{seq2seq_forward.1} parent=1 // pred_region
      _
    $region33: #{seq2seq_forward.1} parent=1 // pred_fallthru
      _
    // Predicated region
    $region34: #{seq2seq_forward.1} parent=1 // pred_check
      _
    $region35: #{seq2seq_forward.1} parent=1 // pred_check_branch
      %43 = sbr.rel (0) target = $region37
    $region36: #{seq2seq_forward.1} parent=1 // pred_region
      _
    $region37: #{seq2seq_forward.1} parent=1 // pred_fallthru
      _
    // Predicated region
    $region38: #{seq2seq_forward.1} parent=1 // pred_check
      _
    $region39: #{seq2seq_forward.1} parent=1 // pred_check_branch
      %45 = sbr.rel (0) target = $region41
    $region40: #{seq2seq_forward.1} parent=1 // pred_region
      _
    $region41: #{seq2seq_forward.1} parent=1 // pred_fallthru
      _
    // Predicated region
    $region42: #{seq2seq_forward.1} parent=1 // pred_check
      _
    $region43: #{seq2seq_forward.1} parent=1 // pred_check_branch
      %47 = sbr.rel (0) target = $region45
    $region44: #{seq2seq_forward.1} parent=1 // pred_region
      _
    $region45: #{seq2seq_forward.1} parent=1 // pred_fallthru
      _
    // Predicated region
    $region46: #{seq2seq_forward.1} parent=1 // pred_check
      _
    $region47: #{seq2seq_forward.1} parent=1 // pred_check_branch
      %49 = sbr.rel (0) target = $region49
    $region48: #{seq2seq_forward.1} parent=1 // pred_region
      _
    $region49: #{seq2seq_forward.1} parent=1 // pred_fallthru
      _
    // Predicated region
    $region50: #{seq2seq_forward.1} parent=1 // pred_check
      _
    $region51: #{seq2seq_forward.1} parent=1 // pred_check_branch
      %51 = sbr.rel (0) target = $region53
    $region52: #{seq2seq_forward.1} parent=1 // pred_region
      %52 = dma.done [#allocation6], 16
    $region53: #{seq2seq_forward.1} parent=1 // pred_fallthru
      _
    %53 = sfence
    %55 = vst [vmem:[#allocation2] sm:$0xff] 0.0
    %56 = vst [vmem:[#allocation3] sm:$0xff] 0.0
    loop: start=0, step=1, limit=6
    $region54: #{seq2seq_forward.1} parent=1 // loop_pre_header
      _
    $region55: #{seq2seq_forward.1} parent=1 // loop_header
      %s58 = sphi 0, %s62
      %p59 = scmp.ge.s32.totalorder %s58, 6
    $region56: #{seq2seq_forward.1} parent=1 // loop_header_branch
      %61 = sbr.rel (%p59) target = $region60
    $region57: #{seq2seq_forward.1} parent=1 // loop_body
      %s63 = smul.u32 %s58, 8
      %s64 = scalar_lea.vmem %s1, %s63
      %v65 = vld [vmem:[%s64] sm:$0xff]
      %v66 = vld [vmem:[#allocation2] sm:$0xff]
      %v67 = vld [vmem:[#allocation3] sm:$0xff]
      %v68 = vpack.c.bf16 %v65, %v65
      %v69 = vld [vmem:[%s3] sm:$0xff]
      %v70 = vld [vmem:[%s3 + $0x8] sm:$0xff]
      %v71 = vld [vmem:[%s3 + $0x10] sm:$0xff]
      %v72 = vld [vmem:[%s3 + $0x18] sm:$0xff]
      %v73 = vld [vmem:[%s3 + $0x20] sm:$0xff]
      %v74 = vld [vmem:[%s3 + $0x28] sm:$0xff]
      %v75 = vld [vmem:[%s3 + $0x30] sm:$0xff]
      %v76 = vld [vmem:[%s3 + $0x38] sm:$0xff]
      %v77 = vld [vmem:[%s3 + $0x40] sm:$0xff]
      %v78 = vld [vmem:[%s3 + $0x48] sm:$0xff]
      %v79 = vld [vmem:[%s3 + $0x50] sm:$0xff]
      %v80 = vld [vmem:[%s3 + $0x58] sm:$0xff]
      %v81 = vld [vmem:[%s3 + $0x60] sm:$0xff]
      %v82 = vld [vmem:[%s3 + $0x68] sm:$0xff]
      %v83 = vld [vmem:[%s3 + $0x70] sm:$0xff]
      %v84 = vld [vmem:[%s3 + $0x78] sm:$0xff]
      %v85 = vld [vmem:[%s3 + $0x80] sm:$0xff]
      %v86 = vld [vmem:[%s3 + $0x88] sm:$0xff]
      %v87 = vld [vmem:[%s3 + $0x90] sm:$0xff]
      %v88 = vld [vmem:[%s3 + $0x98] sm:$0xff]
      %v89 = vld [vmem:[%s3 + $0xa0] sm:$0xff]
      %v90 = vld [vmem:[%s3 + $0xa8] sm:$0xff]
      %v91 = vld [vmem:[%s3 + $0xb0] sm:$0xff]
      %v92 = vld [vmem:[%s3 + $0xb8] sm:$0xff]
      %v93 = vld [vmem:[%s3 + $0xc0] sm:$0xff]
      %v94 = vld [vmem:[%s3 + $0xc8] sm:$0xff]
      %v95 = vld [vmem:[%s3 + $0xd0] sm:$0xff]
      %v96 = vld [vmem:[%s3 + $0xd8] sm:$0xff]
      %v97 = vld [vmem:[%s3 + $0xe0] sm:$0xff]
      %v98 = vld [vmem:[%s3 + $0xe8] sm:$0xff]
      %v99 = vld [vmem:[%s3 + $0xf0] sm:$0xff]
      %v100 = vld [vmem:[%s3 + $0xf8] sm:$0xff]
      %v101 = vpack.c.bf16 %v66, %v66
      %v102 = vld [vmem:[%s4] sm:$0xff]
      %v103 = vld [vmem:[%s4 + $0x8] sm:$0xff]
      %v104 = vld [vmem:[%s4 + $0x10] sm:$0xff]
      %v105 = vld [vmem:[%s4 + $0x18] sm:$0xff]
      %v106 = vld [vmem:[%s4 + $0x20] sm:$0xff]
      %v107 = vld [vmem:[%s4 + $0x28] sm:$0xff]
      %v108 = vld [vmem:[%s4 + $0x30] sm:$0xff]
      %v109 = vld [vmem:[%s4 + $0x38] sm:$0xff]
      %v110 = vld [vmem:[%s4 + $0x40] sm:$0xff]
      %v111 = vld [vmem:[%s4 + $0x48] sm:$0xff]
      %v112 = vld [vmem:[%s4 + $0x50] sm:$0xff]
      %v113 = vld [vmem:[%s4 + $0x58] sm:$0xff]
      %v114 = vld [vmem:[%s4 + $0x60] sm:$0xff]
      %v115 = vld [vmem:[%s4 + $0x68] sm:$0xff]
      %v116 = vld [vmem:[%s4 + $0x70] sm:$0xff]
      %v117 = vld [vmem:[%s4 + $0x78] sm:$0xff]
      %v118 = vld [vmem:[%s4 + $0x80] sm:$0xff]
      %v119 = vld [vmem:[%s4 + $0x88] sm:$0xff]
      %v120 = vld [vmem:[%s4 + $0x90] sm:$0xff]
      %v121 = vld [vmem:[%s4 + $0x98] sm:$0xff]
      %v122 = vld [vmem:[%s4 + $0xa0] sm:$0xff]
      %v123 = vld [vmem:[%s4 + $0xa8] sm:$0xff]
      %v124 = vld [vmem:[%s4 + $0xb0] sm:$0xff]
      %v125 = vld [vmem:[%s4 + $0xb8] sm:$0xff]
      %v126 = vld [vmem:[%s4 + $0xc0] sm:$0xff]
      %v127 = vld [vmem:[%s4 + $0xc8] sm:$0xff]
      %v128 = vld [vmem:[%s4 + $0xd0] sm:$0xff]
      %v129 = vld [vmem:[%s4 + $0xd8] sm:$0xff]
      %v130 = vld [vmem:[%s4 + $0xe0] sm:$0xff]
      %v131 = vld [vmem:[%s4 + $0xe8] sm:$0xff]
      %v132 = vld [vmem:[%s4 + $0xf0] sm:$0xff]
      %v133 = vld [vmem:[%s4 + $0xf8] sm:$0xff]
      %v166 = vunpack.c.l.b16 %v102
      %v167 = vunpack.c.h.b16 %v102
      %v168 = vunpack.c.l.b16 %v103
      %v169 = vunpack.c.h.b16 %v103
      %v170 = vunpack.c.l.b16 %v104
      %v171 = vunpack.c.h.b16 %v104
      %v172 = vunpack.c.l.b16 %v105
      %v173 = vunpack.c.h.b16 %v105
      %v174 = vunpack.c.l.b16 %v106
      %v175 = vunpack.c.h.b16 %v106
      %v176 = vunpack.c.l.b16 %v107
      %v177 = vunpack.c.h.b16 %v107
      %v178 = vunpack.c.l.b16 %v108
      %v179 = vunpack.c.h.b16 %v108
      %v180 = vunpack.c.l.b16 %v109
      %v181 = vunpack.c.h.b16 %v109
      %v182 = vunpack.c.l.b16 %v110
      %v183 = vunpack.c.h.b16 %v110
      %v184 = vunpack.c.l.b16 %v111
      %v185 = vunpack.c.h.b16 %v111
      %v186 = vunpack.c.l.b16 %v112
      %v187 = vunpack.c.h.b16 %v112
      %v188 = vunpack.c.l.b16 %v113
      %v189 = vunpack.c.h.b16 %v113
      %v190 = vunpack.c.l.b16 %v114
      %v191 = vunpack.c.h.b16 %v114
      %v192 = vunpack.c.l.b16 %v115
      %v193 = vunpack.c.h.b16 %v115
      %v194 = vunpack.c.l.b16 %v116
      %v195 = vunpack.c.h.b16 %v116
      %v196 = vunpack.c.l.b16 %v117
      %v197 = vunpack.c.h.b16 %v117
      %v198 = vunpack.c.l.b16 %v118
      %v199 = vunpack.c.h.b16 %v118
      %v200 = vunpack.c.l.b16 %v119
      %v201 = vunpack.c.h.b16 %v119
      %v202 = vunpack.c.l.b16 %v120
      %v203 = vunpack.c.h.b16 %v120
      %v204 = vunpack.c.l.b16 %v121
      %v205 = vunpack.c.h.b16 %v121
      %v206 = vunpack.c.l.b16 %v122
      %v207 = vunpack.c.h.b16 %v122
      %v208 = vunpack.c.l.b16 %v123
      %v209 = vunpack.c.h.b16 %v123
      %v210 = vunpack.c.l.b16 %v124
      %v211 = vunpack.c.h.b16 %v124
      %v212 = vunpack.c.l.b16 %v125
      %v213 = vunpack.c.h.b16 %v125
      %v214 = vunpack.c.l.b16 %v126
      %v215 = vunpack.c.h.b16 %v126
      %v216 = vunpack.c.l.b16 %v127
      %v217 = vunpack.c.h.b16 %v127
      %v218 = vunpack.c.l.b16 %v128
      %v219 = vunpack.c.h.b16 %v128
      %v220 = vunpack.c.l.b16 %v129
      %v221 = vunpack.c.h.b16 %v129
      %v222 = vunpack.c.l.b16 %v130
      %v223 = vunpack.c.h.b16 %v130
      %v224 = vunpack.c.l.b16 %v131
      %v225 = vunpack.c.h.b16 %v131
      %v226 = vunpack.c.l.b16 %v132
      %v227 = vunpack.c.h.b16 %v132
      %v228 = vunpack.c.l.b16 %v133
      %v229 = vunpack.c.h.b16 %v133
      %v230 = vpack.c.b16 %v170, %v166
      %v231 = vpack.c.b16 %v171, %v167
      %v232 = vpack.c.b16 %v172, %v168
      %v233 = vpack.c.b16 %v173, %v169
      %v234 = vpack.c.b16 %v178, %v174
      %v235 = vpack.c.b16 %v179, %v175
      %v236 = vpack.c.b16 %v180, %v176
      %v237 = vpack.c.b16 %v181, %v177
      %v238 = vpack.c.b16 %v186, %v182
      %v239 = vpack.c.b16 %v187, %v183
      %v240 = vpack.c.b16 %v188, %v184
      %v241 = vpack.c.b16 %v189, %v185
      %v242 = vpack.c.b16 %v194, %v190
      %v243 = vpack.c.b16 %v195, %v191
      %v244 = vpack.c.b16 %v196, %v192
      %v245 = vpack.c.b16 %v197, %v193
      %v246 = vpack.c.b16 %v202, %v198
      %v247 = vpack.c.b16 %v203, %v199
      %v248 = vpack.c.b16 %v204, %v200
      %v249 = vpack.c.b16 %v205, %v201
      %v250 = vpack.c.b16 %v210, %v206
      %v251 = vpack.c.b16 %v211, %v207
      %v252 = vpack.c.b16 %v212, %v208
      %v253 = vpack.c.b16 %v213, %v209
      %v254 = vpack.c.b16 %v218, %v214
      %v255 = vpack.c.b16 %v219, %v215
      %v256 = vpack.c.b16 %v220, %v216
      %v257 = vpack.c.b16 %v221, %v217
      %v258 = vpack.c.b16 %v226, %v222
      %v259 = vpack.c.b16 %v227, %v223
      %v260 = vpack.c.b16 %v228, %v224
      %v261 = vpack.c.b16 %v229, %v225
      %294 = vmatprep.subr.bf16.mxu0 %v231
      %295 = vmatpush1.bf16.msra.mxu0 %v230
      %296 = vmatprep.subr.bf16.mxu0 %v235
      %297 = vmatpush1.bf16.msra.mxu0 %v234
      %298 = vmatprep.subr.bf16.mxu0 %v239
      %299 = vmatpush1.bf16.msra.mxu0 %v238
      %300 = vmatprep.subr.bf16.mxu0 %v243
      %301 = vmatpush1.bf16.msra.mxu0 %v242
      %302 = vmatprep.subr.bf16.mxu0 %v247
      %303 = vmatpush1.bf16.msra.mxu0 %v246
      %304 = vmatprep.subr.bf16.mxu0 %v251
      %305 = vmatpush1.bf16.msra.mxu0 %v250
      %306 = vmatprep.subr.bf16.mxu0 %v255
      %307 = vmatpush1.bf16.msra.mxu0 %v254
      %308 = vmatprep.subr.bf16.mxu0 %v259
      %309 = vmatpush1.bf16.msra.mxu0 %v258
      %310 = vmatprep.subr.bf16.mxu0 0
      %311 = vmatpush1.bf16.msra.mxu0 0
      %312 = vmatprep.subr.bf16.mxu0 0
      %313 = vmatpush1.bf16.msra.mxu0 0
      %314 = vmatprep.subr.bf16.mxu0 0
      %315 = vmatpush1.bf16.msra.mxu0 0
      %316 = vmatprep.subr.bf16.mxu0 0
      %317 = vmatpush1.bf16.msra.mxu0 0
      %318 = vmatprep.subr.bf16.mxu0 0
      %319 = vmatpush1.bf16.msra.mxu0 0
      %320 = vmatprep.subr.bf16.mxu0 0
      %321 = vmatpush1.bf16.msra.mxu0 0
      %322 = vmatprep.subr.bf16.mxu0 0
      %323 = vmatpush1.bf16.msra.mxu0 0
      %324 = vmatprep.subr.bf16.mxu0 0
      %325 = vmatpush1.bf16.msra.mxu0 0
      %326 = vmatprep.mubr.bf16.mxu0 0
      %327 = vmatmul.mubr.bf16.gmra.mrb[0].mxu0 %v101
      %v328 = vpop.f32.mrb[0].mxu0
      %v329 = vadd.f32 0.0, %v328
      %v330 = vpop.f32.mrb[0].mxu0
      %v331 = vadd.f32 0.0, %v330
      %v332 = vpop.f32.mrb[0].mxu0
      %v333 = vpop.f32.mrb[0].mxu0
      %334 = vdwg.mxu0
      %335 = vmatprep.subr.bf16.mxu0 %v233
      %336 = vmatpush1.bf16.msra.mxu0 %v232
      %337 = vmatprep.subr.bf16.mxu0 %v237
      %338 = vmatpush1.bf16.msra.mxu0 %v236
      %339 = vmatprep.subr.bf16.mxu0 %v241
      %340 = vmatpush1.bf16.msra.mxu0 %v240
      %341 = vmatprep.subr.bf16.mxu0 %v245
      %342 = vmatpush1.bf16.msra.mxu0 %v244
      %343 = vmatprep.subr.bf16.mxu0 %v249
      %344 = vmatpush1.bf16.msra.mxu0 %v248
      %345 = vmatprep.subr.bf16.mxu0 %v253
      %346 = vmatpush1.bf16.msra.mxu0 %v252
      %347 = vmatprep.subr.bf16.mxu0 %v257
      %348 = vmatpush1.bf16.msra.mxu0 %v256
      %349 = vmatprep.subr.bf16.mxu0 %v261
      %350 = vmatpush1.bf16.msra.mxu0 %v260
      %351 = vmatprep.subr.bf16.mxu0 0
      %352 = vmatpush1.bf16.msra.mxu0 0
      %353 = vmatprep.subr.bf16.mxu0 0
      %354 = vmatpush1.bf16.msra.mxu0 0
      %355 = vmatprep.subr.bf16.mxu0 0
      %356 = vmatpush1.bf16.msra.mxu0 0
      %357 = vmatprep.subr.bf16.mxu0 0
      %358 = vmatpush1.bf16.msra.mxu0 0
      %359 = vmatprep.subr.bf16.mxu0 0
      %360 = vmatpush1.bf16.msra.mxu0 0
      %361 = vmatprep.subr.bf16.mxu0 0
      %362 = vmatpush1.bf16.msra.mxu0 0
      %363 = vmatprep.subr.bf16.mxu0 0
      %364 = vmatpush1.bf16.msra.mxu0 0
      %365 = vmatprep.subr.bf16.mxu0 0
      %366 = vmatpush1.bf16.msra.mxu0 0
      %367 = vmatprep.mubr.bf16.mxu0 0
      %368 = vmatmul.mubr.bf16.gmra.mrb[0].mxu0 %v101
      %v369 = vpop.f32.mrb[0].mxu0
      %v370 = vadd.f32 0.0, %v369
      %v371 = vpop.f32.mrb[0].mxu0
      %v372 = vadd.f32 0.0, %v371
      %v373 = vpop.f32.mrb[0].mxu0
      %v374 = vpop.f32.mrb[0].mxu0
      %375 = vdwg.mxu0
      %v408 = vunpack.c.l.b16 %v69
      %v409 = vunpack.c.h.b16 %v69
      %v410 = vunpack.c.l.b16 %v70
      %v411 = vunpack.c.h.b16 %v70
      %v412 = vunpack.c.l.b16 %v71
      %v413 = vunpack.c.h.b16 %v71
      %v414 = vunpack.c.l.b16 %v72
      %v415 = vunpack.c.h.b16 %v72
      %v416 = vunpack.c.l.b16 %v73
      %v417 = vunpack.c.h.b16 %v73
      %v418 = vunpack.c.l.b16 %v74
      %v419 = vunpack.c.h.b16 %v74
      %v420 = vunpack.c.l.b16 %v75
      %v421 = vunpack.c.h.b16 %v75
      %v422 = vunpack.c.l.b16 %v76
      %v423 = vunpack.c.h.b16 %v76
      %v424 = vunpack.c.l.b16 %v77
      %v425 = vunpack.c.h.b16 %v77
      %v426 = vunpack.c.l.b16 %v78
      %v427 = vunpack.c.h.b16 %v78
      %v428 = vunpack.c.l.b16 %v79
      %v429 = vunpack.c.h.b16 %v79
      %v430 = vunpack.c.l.b16 %v80
      %v431 = vunpack.c.h.b16 %v80
      %v432 = vunpack.c.l.b16 %v81
      %v433 = vunpack.c.h.b16 %v81
      %v434 = vunpack.c.l.b16 %v82
      %v435 = vunpack.c.h.b16 %v82
      %v436 = vunpack.c.l.b16 %v83
      %v437 = vunpack.c.h.b16 %v83
      %v438 = vunpack.c.l.b16 %v84
      %v439 = vunpack.c.h.b16 %v84
      %v440 = vunpack.c.l.b16 %v85
      %v441 = vunpack.c.h.b16 %v85
      %v442 = vunpack.c.l.b16 %v86
      %v443 = vunpack.c.h.b16 %v86
      %v444 = vunpack.c.l.b16 %v87
      %v445 = vunpack.c.h.b16 %v87
      %v446 = vunpack.c.l.b16 %v88
      %v447 = vunpack.c.h.b16 %v88
      %v448 = vunpack.c.l.b16 %v89
      %v449 = vunpack.c.h.b16 %v89
      %v450 = vunpack.c.l.b16 %v90
      %v451 = vunpack.c.h.b16 %v90
      %v452 = vunpack.c.l.b16 %v91
      %v453 = vunpack.c.h.b16 %v91
      %v454 = vunpack.c.l.b16 %v92
      %v455 = vunpack.c.h.b16 %v92
      %v456 = vunpack.c.l.b16 %v93
      %v457 = vunpack.c.h.b16 %v93
      %v458 = vunpack.c.l.b16 %v94
      %v459 = vunpack.c.h.b16 %v94
      %v460 = vunpack.c.l.b16 %v95
      %v461 = vunpack.c.h.b16 %v95
      %v462 = vunpack.c.l.b16 %v96
      %v463 = vunpack.c.h.b16 %v96
      %v464 = vunpack.c.l.b16 %v97
      %v465 = vunpack.c.h.b16 %v97
      %v466 = vunpack.c.l.b16 %v98
      %v467 = vunpack.c.h.b16 %v98
      %v468 = vunpack.c.l.b16 %v99
      %v469 = vunpack.c.h.b16 %v99
      %v470 = vunpack.c.l.b16 %v100
      %v471 = vunpack.c.h.b16 %v100
      %v472 = vpack.c.b16 %v412, %v408
      %v473 = vpack.c.b16 %v413, %v409
      %v474 = vpack.c.b16 %v414, %v410
      %v475 = vpack.c.b16 %v415, %v411
      %v476 = vpack.c.b16 %v420, %v416
      %v477 = vpack.c.b16 %v421, %v417
      %v478 = vpack.c.b16 %v422, %v418
      %v479 = vpack.c.b16 %v423, %v419
      %v480 = vpack.c.b16 %v428, %v424
      %v481 = vpack.c.b16 %v429, %v425
      %v482 = vpack.c.b16 %v430, %v426
      %v483 = vpack.c.b16 %v431, %v427
      %v484 = vpack.c.b16 %v436, %v432
      %v485 = vpack.c.b16 %v437, %v433
      %v486 = vpack.c.b16 %v438, %v434
      %v487 = vpack.c.b16 %v439, %v435
      %v488 = vpack.c.b16 %v444, %v440
      %v489 = vpack.c.b16 %v445, %v441
      %v490 = vpack.c.b16 %v446, %v442
      %v491 = vpack.c.b16 %v447, %v443
      %v492 = vpack.c.b16 %v452, %v448
      %v493 = vpack.c.b16 %v453, %v449
      %v494 = vpack.c.b16 %v454, %v450
      %v495 = vpack.c.b16 %v455, %v451
      %v496 = vpack.c.b16 %v460, %v456
      %v497 = vpack.c.b16 %v461, %v457
      %v498 = vpack.c.b16 %v462, %v458
      %v499 = vpack.c.b16 %v463, %v459
      %v500 = vpack.c.b16 %v468, %v464
      %v501 = vpack.c.b16 %v469, %v465
      %v502 = vpack.c.b16 %v470, %v466
      %v503 = vpack.c.b16 %v471, %v467
      %536 = vmatprep.subr.bf16.mxu0 %v473
      %537 = vmatpush1.bf16.msra.mxu0 %v472
      %538 = vmatprep.subr.bf16.mxu0 %v477
      %539 = vmatpush1.bf16.msra.mxu0 %v476
      %540 = vmatprep.subr.bf16.mxu0 %v481
      %541 = vmatpush1.bf16.msra.mxu0 %v480
      %542 = vmatprep.subr.bf16.mxu0 %v485
      %543 = vmatpush1.bf16.msra.mxu0 %v484
      %544 = vmatprep.subr.bf16.mxu0 %v489
      %545 = vmatpush1.bf16.msra.mxu0 %v488
      %546 = vmatprep.subr.bf16.mxu0 %v493
      %547 = vmatpush1.bf16.msra.mxu0 %v492
      %548 = vmatprep.subr.bf16.mxu0 %v497
      %549 = vmatpush1.bf16.msra.mxu0 %v496
      %550 = vmatprep.subr.bf16.mxu0 %v501
      %551 = vmatpush1.bf16.msra.mxu0 %v500
      %552 = vmatprep.subr.bf16.mxu0 0
      %553 = vmatpush1.bf16.msra.mxu0 0
      %554 = vmatprep.subr.bf16.mxu0 0
      %555 = vmatpush1.bf16.msra.mxu0 0
      %556 = vmatprep.subr.bf16.mxu0 0
      %557 = vmatpush1.bf16.msra.mxu0 0
      %558 = vmatprep.subr.bf16.mxu0 0
      %559 = vmatpush1.bf16.msra.mxu0 0
      %560 = vmatprep.subr.bf16.mxu0 0
      %561 = vmatpush1.bf16.msra.mxu0 0
      %562 = vmatprep.subr.bf16.mxu0 0
      %563 = vmatpush1.bf16.msra.mxu0 0
      %564 = vmatprep.subr.bf16.mxu0 0
      %565 = vmatpush1.bf16.msra.mxu0 0
      %566 = vmatprep.subr.bf16.mxu0 0
      %567 = vmatpush1.bf16.msra.mxu0 0
      %568 = vmatprep.mubr.bf16.mxu0 0
      %569 = vmatmul.mubr.bf16.gmra.mrb[0].mxu0 %v68
      %v570 = vpop.f32.mrb[0].mxu0
      %v571 = vadd.f32 %v329, %v570
      %v572 = vpop.f32.mrb[0].mxu0
      %v573 = vadd.f32 %v331, %v572
      %v574 = vpop.f32.mrb[0].mxu0
      %v575 = vpop.f32.mrb[0].mxu0
      %576 = vdwg.mxu0
      %577 = vmatprep.subr.bf16.mxu0 %v475
      %578 = vmatpush1.bf16.msra.mxu0 %v474
      %579 = vmatprep.subr.bf16.mxu0 %v479
      %580 = vmatpush1.bf16.msra.mxu0 %v478
      %581 = vmatprep.subr.bf16.mxu0 %v483
      %582 = vmatpush1.bf16.msra.mxu0 %v482
      %583 = vmatprep.subr.bf16.mxu0 %v487
      %584 = vmatpush1.bf16.msra.mxu0 %v486
      %585 = vmatprep.subr.bf16.mxu0 %v491
      %586 = vmatpush1.bf16.msra.mxu0 %v490
      %587 = vmatprep.subr.bf16.mxu0 %v495
      %588 = vmatpush1.bf16.msra.mxu0 %v494
      %589 = vmatprep.subr.bf16.mxu0 %v499
      %590 = vmatpush1.bf16.msra.mxu0 %v498
      %591 = vmatprep.subr.bf16.mxu0 %v503
      %592 = vmatpush1.bf16.msra.mxu0 %v502
      %593 = vmatprep.subr.bf16.mxu0 0
      %594 = vmatpush1.bf16.msra.mxu0 0
      %595 = vmatprep.subr.bf16.mxu0 0
      %596 = vmatpush1.bf16.msra.mxu0 0
      %597 = vmatprep.subr.bf16.mxu0 0
      %598 = vmatpush1.bf16.msra.mxu0 0
      %599 = vmatprep.subr.bf16.mxu0 0
      %600 = vmatpush1.bf16.msra.mxu0 0
      %601 = vmatprep.subr.bf16.mxu0 0
      %602 = vmatpush1.bf16.msra.mxu0 0
      %603 = vmatprep.subr.bf16.mxu0 0
      %604 = vmatpush1.bf16.msra.mxu0 0
      %605 = vmatprep.subr.bf16.mxu0 0
      %606 = vmatpush1.bf16.msra.mxu0 0
      %607 = vmatprep.subr.bf16.mxu0 0
      %608 = vmatpush1.bf16.msra.mxu0 0
      %609 = vmatprep.mubr.bf16.mxu0 0
      %610 = vmatmul.mubr.bf16.gmra.mrb[0].mxu0 %v68
      %v611 = vpop.f32.mrb[0].mxu0
      %v612 = vadd.f32 %v370, %v611
      %v613 = vpop.f32.mrb[0].mxu0
      %v614 = vadd.f32 %v372, %v613
      %v615 = vpop.f32.mrb[0].mxu0
      %v616 = vpop.f32.mrb[0].mxu0
      %617 = vdwg.mxu0
      %v618 = vld [vmem:[%s5] sm:$0xff]
      %v619 = vld [vmem:[%s5 + $0x8] sm:$0xff]
      %v620 = vld [vmem:[%s5 + $0x10] sm:$0xff]
      %v621 = vld [vmem:[%s5 + $0x18] sm:$0xff]
      %v622 = vadd.f32 %v571, %v618
      %v623 = vadd.f32 %v573, %v619
      %v624 = vadd.f32 %v612, %v620
      %v625 = vadd.f32 %v614, %v621
      %v626 = vxor.u32 %v622, 2147483648
      %v627 = vmul.f32 %v626, 1.442695
      %v628 = vpow.pop %v627
      %v629 = vadd.f32 %v628, 1.0
      %v630 = vrcp.pop %v629
      %v631 = vmul.f32 1.0, %v630
      %v632 = vxor.u32 %v623, 2147483648
      %v633 = vmul.f32 %v632, 1.442695
      %v634 = vpow.pop %v633
      %v635 = vadd.f32 %v634, 1.0
      %v636 = vrcp.pop %v635
      %v637 = vmul.f32 1.0, %v636
      %v638 = vtanh.pop %v624
      %v639 = vxor.u32 %v625, 2147483648
      %v640 = vmul.f32 %v639, 1.442695
      %v641 = vpow.pop %v640
      %v642 = vadd.f32 %v641, 1.0
      %v643 = vrcp.pop %v642
      %v644 = vmul.f32 1.0, %v643
      %v645 = vmul.f32 %v637, %v67
      %v646 = vmul.f32 %v631, %v638
      %v647 = vadd.f32 %v645, %v646
      %v648 = vtanh.pop %v647
      %v649 = vmul.f32 %v644, %v648
      %650 = vst [vmem:[#allocation2] sm:$0xff] %v649
      %651 = vst [vmem:[#allocation3] sm:$0xff] %v647
    $region58: #{seq2seq_forward.1} parent=1 // loop_footer
      %s62 = sadd.s32 1, %s58
    $region59: #{seq2seq_forward.1} parent=1 // loop_footer_branch
      %57 = sbr.rel target = $region55
    $region60: #{seq2seq_forward.1} parent=1 // loop_exit
      _
    %652 = vst [vmem:[%s12] sm:$0xff] 0.0
    %v653 = vld [vmem:[%s2] sm:$0xff]
    %654 = vst [vmem:[#allocation4] sm:$0xff] %v653
    loop: start=1, step=1, limit=8
    $region61: #{seq2seq_forward.1} parent=1 // loop_pre_header
      _
    $region62: #{seq2seq_forward.1} parent=1 // loop_header
      %s656 = sphi 1, %s660
      %p657 = scmp.ge.s32.totalorder %s656, 8
    $region63: #{seq2seq_forward.1} parent=1 // loop_header_branch
      %659 = sbr.rel (%p657) target = $region67
    $region64: #{seq2seq_forward.1} parent=1 // loop_body
      %v661 = vld [vmem:[#allocation4] sm:$0xff]
      %v662 = vld [vmem:[#allocation2] sm:$0xff]
      %v663 = vld [vmem:[#allocation3] sm:$0xff]
      %v664 = vpack.c.bf16 %v661, %v661
      %v665 = vld [vmem:[%s6] sm:$0xff]
      %v666 = vld [vmem:[%s6 + $0x8] sm:$0xff]
      %v667 = vld [vmem:[%s6 + $0x10] sm:$0xff]
      %v668 = vld [vmem:[%s6 + $0x18] sm:$0xff]
      %v669 = vld [vmem:[%s6 + $0x20] sm:$0xff]
      %v670 = vld [vmem:[%s6 + $0x28] sm:$0xff]
      %v671 = vld [vmem:[%s6 + $0x30] sm:$0xff]
      %v672 = vld [vmem:[%s6 + $0x38] sm:$0xff]
      %v673 = vld [vmem:[%s6 + $0x40] sm:$0xff]
      %v674 = vld [vmem:[%s6 + $0x48] sm:$0xff]
      %v675 = vld [vmem:[%s6 + $0x50] sm:$0xff]
      %v676 = vld [vmem:[%s6 + $0x58] sm:$0xff]
      %v677 = vld [vmem:[%s6 + $0x60] sm:$0xff]
      %v678 = vld [vmem:[%s6 + $0x68] sm:$0xff]
      %v679 = vld [vmem:[%s6 + $0x70] sm:$0xff]
      %v680 = vld [vmem:[%s6 + $0x78] sm:$0xff]
      %v681 = vld [vmem:[%s6 + $0x80] sm:$0xff]
      %v682 = vld [vmem:[%s6 + $0x88] sm:$0xff]
      %v683 = vld [vmem:[%s6 + $0x90] sm:$0xff]
      %v684 = vld [vmem:[%s6 + $0x98] sm:$0xff]
      %v685 = vld [vmem:[%s6 + $0xa0] sm:$0xff]
      %v686 = vld [vmem:[%s6 + $0xa8] sm:$0xff]
      %v687 = vld [vmem:[%s6 + $0xb0] sm:$0xff]
      %v688 = vld [vmem:[%s6 + $0xb8] sm:$0xff]
      %v689 = vld [vmem:[%s6 + $0xc0] sm:$0xff]
      %v690 = vld [vmem:[%s6 + $0xc8] sm:$0xff]
      %v691 = vld [vmem:[%s6 + $0xd0] sm:$0xff]
      %v692 = vld [vmem:[%s6 + $0xd8] sm:$0xff]
      %v693 = vld [vmem:[%s6 + $0xe0] sm:$0xff]
      %v694 = vld [vmem:[%s6 + $0xe8] sm:$0xff]
      %v695 = vld [vmem:[%s6 + $0xf0] sm:$0xff]
      %v696 = vld [vmem:[%s6 + $0xf8] sm:$0xff]
      %v697 = vpack.c.bf16 %v662, %v662
      %v698 = vld [vmem:[%s7] sm:$0xff]
      %v699 = vld [vmem:[%s7 + $0x8] sm:$0xff]
      %v700 = vld [vmem:[%s7 + $0x10] sm:$0xff]
      %v701 = vld [vmem:[%s7 + $0x18] sm:$0xff]
      %v702 = vld [vmem:[%s7 + $0x20] sm:$0xff]
      %v703 = vld [vmem:[%s7 + $0x28] sm:$0xff]
      %v704 = vld [vmem:[%s7 + $0x30] sm:$0xff]
      %v705 = vld [vmem:[%s7 + $0x38] sm:$0xff]
      %v706 = vld [vmem:[%s7 + $0x40] sm:$0xff]
      %v707 = vld [vmem:[%s7 + $0x48] sm:$0xff]
      %v708 = vld [vmem:[%s7 + $0x50] sm:$0xff]
      %v709 = vld [vmem:[%s7 + $0x58] sm:$0xff]
      %v710 = vld [vmem:[%s7 + $0x60] sm:$0xff]
      %v711 = vld [vmem:[%s7 + $0x68] sm:$0xff]
      %v712 = vld [vmem:[%s7 + $0x70] sm:$0xff]
      %v713 = vld [vmem:[%s7 + $0x78] sm:$0xff]
      %v714 = vld [vmem:[%s7 + $0x80] sm:$0xff]
      %v715 = vld [vmem:[%s7 + $0x88] sm:$0xff]
      %v716 = vld [vmem:[%s7 + $0x90] sm:$0xff]
      %v717 = vld [vmem:[%s7 + $0x98] sm:$0xff]
      %v718 = vld [vmem:[%s7 + $0xa0] sm:$0xff]
      %v719 = vld [vmem:[%s7 + $0xa8] sm:$0xff]
      %v720 = vld [vmem:[%s7 + $0xb0] sm:$0xff]
      %v721 = vld [vmem:[%s7 + $0xb8] sm:$0xff]
      %v722 = vld [vmem:[%s7 + $0xc0] sm:$0xff]
      %v723 = vld [vmem:[%s7 + $0xc8] sm:$0xff]
      %v724 = vld [vmem:[%s7 + $0xd0] sm:$0xff]
      %v725 = vld [vmem:[%s7 + $0xd8] sm:$0xff]
      %v726 = vld [vmem:[%s7 + $0xe0] sm:$0xff]
      %v727 = vld [vmem:[%s7 + $0xe8] sm:$0xff]
      %v728 = vld [vmem:[%s7 + $0xf0] sm:$0xff]
      %v729 = vld [vmem:[%s7 + $0xf8] sm:$0xff]
      %v762 = vunpack.c.l.b16 %v698
      %v763 = vunpack.c.h.b16 %v698
      %v764 = vunpack.c.l.b16 %v699
      %v765 = vunpack.c.h.b16 %v699
      %v766 = vunpack.c.l.b16 %v700
      %v767 = vunpack.c.h.b16 %v700
      %v768 = vunpack.c.l.b16 %v701
      %v769 = vunpack.c.h.b16 %v701
      %v770 = vunpack.c.l.b16 %v702
      %v771 = vunpack.c.h.b16 %v702
      %v772 = vunpack.c.l.b16 %v703
      %v773 = vunpack.c.h.b16 %v703
      %v774 = vunpack.c.l.b16 %v704
      %v775 = vunpack.c.h.b16 %v704
      %v776 = vunpack.c.l.b16 %v705
      %v777 = vunpack.c.h.b16 %v705
      %v778 = vunpack.c.l.b16 %v706
      %v779 = vunpack.c.h.b16 %v706
      %v780 = vunpack.c.l.b16 %v707
      %v781 = vunpack.c.h.b16 %v707
      %v782 = vunpack.c.l.b16 %v708
      %v783 = vunpack.c.h.b16 %v708
      %v784 = vunpack.c.l.b16 %v709
      %v785 = vunpack.c.h.b16 %v709
      %v786 = vunpack.c.l.b16 %v710
      %v787 = vunpack.c.h.b16 %v710
      %v788 = vunpack.c.l.b16 %v711
      %v789 = vunpack.c.h.b16 %v711
      %v790 = vunpack.c.l.b16 %v712
      %v791 = vunpack.c.h.b16 %v712
      %v792 = vunpack.c.l.b16 %v713
      %v793 = vunpack.c.h.b16 %v713
      %v794 = vunpack.c.l.b16 %v714
      %v795 = vunpack.c.h.b16 %v714
      %v796 = vunpack.c.l.b16 %v715
      %v797 = vunpack.c.h.b16 %v715
      %v798 = vunpack.c.l.b16 %v716
      %v799 = vunpack.c.h.b16 %v716
      %v800 = vunpack.c.l.b16 %v717
      %v801 = vunpack.c.h.b16 %v717
      %v802 = vunpack.c.l.b16 %v718
      %v803 = vunpack.c.h.b16 %v718
      %v804 = vunpack.c.l.b16 %v719
      %v805 = vunpack.c.h.b16 %v719
      %v806 = vunpack.c.l.b16 %v720
      %v807 = vunpack.c.h.b16 %v720
      %v808 = vunpack.c.l.b16 %v721
      %v809 = vunpack.c.h.b16 %v721
      %v810 = vunpack.c.l.b16 %v722
      %v811 = vunpack.c.h.b16 %v722
      %v812 = vunpack.c.l.b16 %v723
      %v813 = vunpack.c.h.b16 %v723
      %v814 = vunpack.c.l.b16 %v724
      %v815 = vunpack.c.h.b16 %v724
      %v816 = vunpack.c.l.b16 %v725
      %v817 = vunpack.c.h.b16 %v725
      %v818 = vunpack.c.l.b16 %v726
      %v819 = vunpack.c.h.b16 %v726
      %v820 = vunpack.c.l.b16 %v727
      %v821 = vunpack.c.h.b16 %v727
      %v822 = vunpack.c.l.b16 %v728
      %v823 = vunpack.c.h.b16 %v728
      %v824 = vunpack.c.l.b16 %v729
      %v825 = vunpack.c.h.b16 %v729
      %v826 = vpack.c.b16 %v766, %v762
      %v827 = vpack.c.b16 %v767, %v763
      %v828 = vpack.c.b16 %v768, %v764
      %v829 = vpack.c.b16 %v769, %v765
      %v830 = vpack.c.b16 %v774, %v770
      %v831 = vpack.c.b16 %v775, %v771
      %v832 = vpack.c.b16 %v776, %v772
      %v833 = vpack.c.b16 %v777, %v773
      %v834 = vpack.c.b16 %v782, %v778
      %v835 = vpack.c.b16 %v783, %v779
      %v836 = vpack.c.b16 %v784, %v780
      %v837 = vpack.c.b16 %v785, %v781
      %v838 = vpack.c.b16 %v790, %v786
      %v839 = vpack.c.b16 %v791, %v787
      %v840 = vpack.c.b16 %v792, %v788
      %v841 = vpack.c.b16 %v793, %v789
      %v842 = vpack.c.b16 %v798, %v794
      %v843 = vpack.c.b16 %v799, %v795
      %v844 = vpack.c.b16 %v800, %v796
      %v845 = vpack.c.b16 %v801, %v797
      %v846 = vpack.c.b16 %v806, %v802
      %v847 = vpack.c.b16 %v807, %v803
      %v848 = vpack.c.b16 %v808, %v804
      %v849 = vpack.c.b16 %v809, %v805
      %v850 = vpack.c.b16 %v814, %v810
      %v851 = vpack.c.b16 %v815, %v811
      %v852 = vpack.c.b16 %v816, %v812
      %v853 = vpack.c.b16 %v817, %v813
      %v854 = vpack.c.b16 %v822, %v818
      %v855 = vpack.c.b16 %v823, %v819
      %v856 = vpack.c.b16 %v824, %v820
      %v857 = vpack.c.b16 %v825, %v821
      %890 = vmatprep.subr.bf16.mxu0 %v827
      %891 = vmatpush1.bf16.msra.mxu0 %v826
      %892 = vmatprep.subr.bf16.mxu0 %v831
      %893 = vmatpush1.bf16.msra.mxu0 %v830
      %894 = vmatprep.subr.bf16.mxu0 %v835
      %895 = vmatpush1.bf16.msra.mxu0 %v834
      %896 = vmatprep.subr.bf16.mxu0 %v839
      %897 = vmatpush1.bf16.msra.mxu0 %v838
      %898 = vmatprep.subr.bf16.mxu0 %v843
      %899 = vmatpush1.bf16.msra.mxu0 %v842
      %900 = vmatprep.subr.bf16.mxu0 %v847
      %901 = vmatpush1.bf16.msra.mxu0 %v846
      %902 = vmatprep.subr.bf16.mxu0 %v851
      %903 = vmatpush1.bf16.msra.mxu0 %v850
      %904 = vmatprep.subr.bf16.mxu0 %v855
      %905 = vmatpush1.bf16.msra.mxu0 %v854
      %906 = vmatprep.subr.bf16.mxu0 0
      %907 = vmatpush1.bf16.msra.mxu0 0
      %908 = vmatprep.subr.bf16.mxu0 0
      %909 = vmatpush1.bf16.msra.mxu0 0
      %910 = vmatprep.subr.bf16.mxu0 0
      %911 = vmatpush1.bf16.msra.mxu0 0
      %912 = vmatprep.subr.bf16.mxu0 0
      %913 = vmatpush1.bf16.msra.mxu0 0
      %914 = vmatprep.subr.bf16.mxu0 0
      %915 = vmatpush1.bf16.msra.mxu0 0
      %916 = vmatprep.subr.bf16.mxu0 0
      %917 = vmatpush1.bf16.msra.mxu0 0
      %918 = vmatprep.subr.bf16.mxu0 0
      %919 = vmatpush1.bf16.msra.mxu0 0
      %920 = vmatprep.subr.bf16.mxu0 0
      %921 = vmatpush1.bf16.msra.mxu0 0
      %922 = vmatprep.mubr.bf16.mxu0 0
      %923 = vmatmul.mubr.bf16.gmra.mrb[0].mxu0 %v697
      %v924 = vpop.f32.mrb[0].mxu0
      %v925 = vadd.f32 0.0, %v924
      %v926 = vpop.f32.mrb[0].mxu0
      %v927 = vadd.f32 0.0, %v926
      %v928 = vpop.f32.mrb[0].mxu0
      %v929 = vpop.f32.mrb[0].mxu0
      %930 = vdwg.mxu0
      %931 = vmatprep.subr.bf16.mxu0 %v829
      %932 = vmatpush1.bf16.msra.mxu0 %v828
      %933 = vmatprep.subr.bf16.mxu0 %v833
      %934 = vmatpush1.bf16.msra.mxu0 %v832
      %935 = vmatprep.subr.bf16.mxu0 %v837
      %936 = vmatpush1.bf16.msra.mxu0 %v836
      %937 = vmatprep.subr.bf16.mxu0 %v841
      %938 = vmatpush1.bf16.msra.mxu0 %v840
      %939 = vmatprep.subr.bf16.mxu0 %v845
      %940 = vmatpush1.bf16.msra.mxu0 %v844
      %941 = vmatprep.subr.bf16.mxu0 %v849
      %942 = vmatpush1.bf16.msra.mxu0 %v848
      %943 = vmatprep.subr.bf16.mxu0 %v853
      %944 = vmatpush1.bf16.msra.mxu0 %v852
      %945 = vmatprep.subr.bf16.mxu0 %v857
      %946 = vmatpush1.bf16.msra.mxu0 %v856
      %947 = vmatprep.subr.bf16.mxu0 0
      %948 = vmatpush1.bf16.msra.mxu0 0
      %949 = vmatprep.subr.bf16.mxu0 0
      %950 = vmatpush1.bf16.msra.mxu0 0
      %951 = vmatprep.subr.bf16.mxu0 0
      %952 = vmatpush1.bf16.msra.mxu0 0
      %953 = vmatprep.subr.bf16.mxu0 0
      %954 = vmatpush1.bf16.msra.mxu0 0
      %955 = vmatprep.subr.bf16.mxu0 0
      %956 = vmatpush1.bf16.msra.mxu0 0
      %957 = vmatprep.subr.bf16.mxu0 0
      %958 = vmatpush1.bf16.msra.mxu0 0
      %959 = vmatprep.subr.bf16.mxu0 0
      %960 = vmatpush1.bf16.msra.mxu0 0
      %961 = vmatprep.subr.bf16.mxu0 0
      %962 = vmatpush1.bf16.msra.mxu0 0
      %963 = vmatprep.mubr.bf16.mxu0 0
      %964 = vmatmul.mubr.bf16.gmra.mrb[0].mxu0 %v697
      %v965 = vpop.f32.mrb[0].mxu0
      %v966 = vadd.f32 0.0, %v965
      %v967 = vpop.f32.mrb[0].mxu0
      %v968 = vadd.f32 0.0, %v967
      %v969 = vpop.f32.mrb[0].mxu0
      %v970 = vpop.f32.mrb[0].mxu0
      %971 = vdwg.mxu0
      %v1004 = vunpack.c.l.b16 %v665
      %v1005 = vunpack.c.h.b16 %v665
      %v1006 = vunpack.c.l.b16 %v666
      %v1007 = vunpack.c.h.b16 %v666
      %v1008 = vunpack.c.l.b16 %v667
      %v1009 = vunpack.c.h.b16 %v667
      %v1010 = vunpack.c.l.b16 %v668
      %v1011 = vunpack.c.h.b16 %v668
      %v1012 = vunpack.c.l.b16 %v669
      %v1013 = vunpack.c.h.b16 %v669
      %v1014 = vunpack.c.l.b16 %v670
      %v1015 = vunpack.c.h.b16 %v670
      %v1016 = vunpack.c.l.b16 %v671
      %v1017 = vunpack.c.h.b16 %v671
      %v1018 = vunpack.c.l.b16 %v672
      %v1019 = vunpack.c.h.b16 %v672
      %v1020 = vunpack.c.l.b16 %v673
      %v1021 = vunpack.c.h.b16 %v673
      %v1022 = vunpack.c.l.b16 %v674
      %v1023 = vunpack.c.h.b16 %v674
      %v1024 = vunpack.c.l.b16 %v675
      %v1025 = vunpack.c.h.b16 %v675
      %v1026 = vunpack.c.l.b16 %v676
      %v1027 = vunpack.c.h.b16 %v676
      %v1028 = vunpack.c.l.b16 %v677
      %v1029 = vunpack.c.h.b16 %v677
      %v1030 = vunpack.c.l.b16 %v678
      %v1031 = vunpack.c.h.b16 %v678
      %v1032 = vunpack.c.l.b16 %v679
      %v1033 = vunpack.c.h.b16 %v679
      %v1034 = vunpack.c.l.b16 %v680
      %v1035 = vunpack.c.h.b16 %v680
      %v1036 = vunpack.c.l.b16 %v681
      %v1037 = vunpack.c.h.b16 %v681
      %v1038 = vunpack.c.l.b16 %v682
      %v1039 = vunpack.c.h.b16 %v682
      %v1040 = vunpack.c.l.b16 %v683
      %v1041 = vunpack.c.h.b16 %v683
      %v1042 = vunpack.c.l.b16 %v684
      %v1043 = vunpack.c.h.b16 %v684
      %v1044 = vunpack.c.l.b16 %v685
      %v1045 = vunpack.c.h.b16 %v685
      %v1046 = vunpack.c.l.b16 %v686
      %v1047 = vunpack.c.h.b16 %v686
      %v1048 = vunpack.c.l.b16 %v687
      %v1049 = vunpack.c.h.b16 %v687
      %v1050 = vunpack.c.l.b16 %v688
      %v1051 = vunpack.c.h.b16 %v688
      %v1052 = vunpack.c.l.b16 %v689
      %v1053 = vunpack.c.h.b16 %v689
      %v1054 = vunpack.c.l.b16 %v690
      %v1055 = vunpack.c.h.b16 %v690
      %v1056 = vunpack.c.l.b16 %v691
      %v1057 = vunpack.c.h.b16 %v691
      %v1058 = vunpack.c.l.b16 %v692
      %v1059 = vunpack.c.h.b16 %v692
      %v1060 = vunpack.c.l.b16 %v693
      %v1061 = vunpack.c.h.b16 %v693
      %v1062 = vunpack.c.l.b16 %v694
      %v1063 = vunpack.c.h.b16 %v694
      %v1064 = vunpack.c.l.b16 %v695
      %v1065 = vunpack.c.h.b16 %v695
      %v1066 = vunpack.c.l.b16 %v696
      %v1067 = vunpack.c.h.b16 %v696
      %v1068 = vpack.c.b16 %v1008, %v1004
      %v1069 = vpack.c.b16 %v1009, %v1005
      %v1070 = vpack.c.b16 %v1010, %v1006
      %v1071 = vpack.c.b16 %v1011, %v1007
      %v1072 = vpack.c.b16 %v1016, %v1012
      %v1073 = vpack.c.b16 %v1017, %v1013
      %v1074 = vpack.c.b16 %v1018, %v1014
      %v1075 = vpack.c.b16 %v1019, %v1015
      %v1076 = vpack.c.b16 %v1024, %v1020
      %v1077 = vpack.c.b16 %v1025, %v1021
      %v1078 = vpack.c.b16 %v1026, %v1022
      %v1079 = vpack.c.b16 %v1027, %v1023
      %v1080 = vpack.c.b16 %v1032, %v1028
      %v1081 = vpack.c.b16 %v1033, %v1029
      %v1082 = vpack.c.b16 %v1034, %v1030
      %v1083 = vpack.c.b16 %v1035, %v1031
      %v1084 = vpack.c.b16 %v1040, %v1036
      %v1085 = vpack.c.b16 %v1041, %v1037
      %v1086 = vpack.c.b16 %v1042, %v1038
      %v1087 = vpack.c.b16 %v1043, %v1039
      %v1088 = vpack.c.b16 %v1048, %v1044
      %v1089 = vpack.c.b16 %v1049, %v1045
      %v1090 = vpack.c.b16 %v1050, %v1046
      %v1091 = vpack.c.b16 %v1051, %v1047
      %v1092 = vpack.c.b16 %v1056, %v1052
      %v1093 = vpack.c.b16 %v1057, %v1053
      %v1094 = vpack.c.b16 %v1058, %v1054
      %v1095 = vpack.c.b16 %v1059, %v1055
      %v1096 = vpack.c.b16 %v1064, %v1060
      %v1097 = vpack.c.b16 %v1065, %v1061
      %v1098 = vpack.c.b16 %v1066, %v1062
      %v1099 = vpack.c.b16 %v1067, %v1063
      %1132 = vmatprep.subr.bf16.mxu0 %v1069
      %1133 = vmatpush1.bf16.msra.mxu0 %v1068
      %1134 = vmatprep.subr.bf16.mxu0 %v1073
      %1135 = vmatpush1.bf16.msra.mxu0 %v1072
      %1136 = vmatprep.subr.bf16.mxu0 %v1077
      %1137 = vmatpush1.bf16.msra.mxu0 %v1076
      %1138 = vmatprep.subr.bf16.mxu0 %v1081
      %1139 = vmatpush1.bf16.msra.mxu0 %v1080
      %1140 = vmatprep.subr.bf16.mxu0 %v1085
      %1141 = vmatpush1.bf16.msra.mxu0 %v1084
      %1142 = vmatprep.subr.bf16.mxu0 %v1089
      %1143 = vmatpush1.bf16.msra.mxu0 %v1088
      %1144 = vmatprep.subr.bf16.mxu0 %v1093
      %1145 = vmatpush1.bf16.msra.mxu0 %v1092
      %1146 = vmatprep.subr.bf16.mxu0 %v1097
      %1147 = vmatpush1.bf16.msra.mxu0 %v1096
      %1148 = vmatprep.subr.bf16.mxu0 0
      %1149 = vmatpush1.bf16.msra.mxu0 0
      %1150 = vmatprep.subr.bf16.mxu0 0
      %1151 = vmatpush1.bf16.msra.mxu0 0
      %1152 = vmatprep.subr.bf16.mxu0 0
      %1153 = vmatpush1.bf16.msra.mxu0 0
      %1154 = vmatprep.subr.bf16.mxu0 0
      %1155 = vmatpush1.bf16.msra.mxu0 0
      %1156 = vmatprep.subr.bf16.mxu0 0
      %1157 = vmatpush1.bf16.msra.mxu0 0
      %1158 = vmatprep.subr.bf16.mxu0 0
      %1159 = vmatpush1.bf16.msra.mxu0 0
      %1160 = vmatprep.subr.bf16.mxu0 0
      %1161 = vmatpush1.bf16.msra.mxu0 0
      %1162 = vmatprep.subr.bf16.mxu0 0
      %1163 = vmatpush1.bf16.msra.mxu0 0
      %1164 = vmatprep.mubr.bf16.mxu0 0
      %1165 = vmatmul.mubr.bf16.gmra.mrb[0].mxu0 %v664
      %v1166 = vpop.f32.mrb[0].mxu0
      %v1167 = vadd.f32 %v925, %v1166
      %v1168 = vpop.f32.mrb[0].mxu0
      %v1169 = vadd.f32 %v927, %v1168
      %v1170 = vpop.f32.mrb[0].mxu0
      %v1171 = vpop.f32.mrb[0].mxu0
      %1172 = vdwg.mxu0
      %1173 = vmatprep.subr.bf16.mxu0 %v1071
      %1174 = vmatpush1.bf16.msra.mxu0 %v1070
      %1175 = vmatprep.subr.bf16.mxu0 %v1075
      %1176 = vmatpush1.bf16.msra.mxu0 %v1074
      %1177 = vmatprep.subr.bf16.mxu0 %v1079
      %1178 = vmatpush1.bf16.msra.mxu0 %v1078
      %1179 = vmatprep.subr.bf16.mxu0 %v1083
      %1180 = vmatpush1.bf16.msra.mxu0 %v1082
      %1181 = vmatprep.subr.bf16.mxu0 %v1087
      %1182 = vmatpush1.bf16.msra.mxu0 %v1086
      %1183 = vmatprep.subr.bf16.mxu0 %v1091
      %1184 = vmatpush1.bf16.msra.mxu0 %v1090
      %1185 = vmatprep.subr.bf16.mxu0 %v1095
      %1186 = vmatpush1.bf16.msra.mxu0 %v1094
      %1187 = vmatprep.subr.bf16.mxu0 %v1099
      %1188 = vmatpush1.bf16.msra.mxu0 %v1098
      %1189 = vmatprep.subr.bf16.mxu0 0
      %1190 = vmatpush1.bf16.msra.mxu0 0
      %1191 = vmatprep.subr.bf16.mxu0 0
      %1192 = vmatpush1.bf16.msra.mxu0 0
      %1193 = vmatprep.subr.bf16.mxu0 0
      %1194 = vmatpush1.bf16.msra.mxu0 0
      %1195 = vmatprep.subr.bf16.mxu0 0
      %1196 = vmatpush1.bf16.msra.mxu0 0
      %1197 = vmatprep.subr.bf16.mxu0 0
      %1198 = vmatpush1.bf16.msra.mxu0 0
      %1199 = vmatprep.subr.bf16.mxu0 0
      %1200 = vmatpush1.bf16.msra.mxu0 0
      %1201 = vmatprep.subr.bf16.mxu0 0
      %1202 = vmatpush1.bf16.msra.mxu0 0
      %1203 = vmatprep.subr.bf16.mxu0 0
      %1204 = vmatpush1.bf16.msra.mxu0 0
      %1205 = vmatprep.mubr.bf16.mxu0 0
      %1206 = vmatmul.mubr.bf16.gmra.mrb[0].mxu0 %v664
      %v1207 = vpop.f32.mrb[0].mxu0
      %v1208 = vadd.f32 %v966, %v1207
      %v1209 = vpop.f32.mrb[0].mxu0
      %v1210 = vadd.f32 %v968, %v1209
      %v1211 = vpop.f32.mrb[0].mxu0
      %v1212 = vpop.f32.mrb[0].mxu0
      %1213 = vdwg.mxu0
      %v1214 = vld [vmem:[%s8] sm:$0xff]
      %v1215 = vld [vmem:[%s8 + $0x8] sm:$0xff]
      %v1216 = vld [vmem:[%s8 + $0x10] sm:$0xff]
      %v1217 = vld [vmem:[%s8 + $0x18] sm:$0xff]
      %v1218 = vadd.f32 %v1167, %v1214
      %v1219 = vadd.f32 %v1169, %v1215
      %v1220 = vadd.f32 %v1208, %v1216
      %v1221 = vadd.f32 %v1210, %v1217
      %v1222 = vxor.u32 %v1218, 2147483648
      %v1223 = vmul.f32 %v1222, 1.442695
      %v1224 = vpow.pop %v1223
      %v1225 = vadd.f32 %v1224, 1.0
      %v1226 = vrcp.pop %v1225
      %v1227 = vmul.f32 1.0, %v1226
      %v1228 = vxor.u32 %v1219, 2147483648
      %v1229 = vmul.f32 %v1228, 1.442695
      %v1230 = vpow.pop %v1229
      %v1231 = vadd.f32 %v1230, 1.0
      %v1232 = vrcp.pop %v1231
      %v1233 = vmul.f32 1.0, %v1232
      %v1234 = vtanh.pop %v1220
      %v1235 = vxor.u32 %v1221, 2147483648
      %v1236 = vmul.f32 %v1235, 1.442695
      %v1237 = vpow.pop %v1236
      %v1238 = vadd.f32 %v1237, 1.0
      %v1239 = vrcp.pop %v1238
      %v1240 = vmul.f32 1.0, %v1239
      %v1241 = vmul.f32 %v1233, %v663
      %v1242 = vmul.f32 %v1227, %v1234
      %v1243 = vadd.f32 %v1241, %v1242
      %v1244 = vtanh.pop %v1243
      %v1245 = vmul.f32 %v1240, %v1244
      %1246 = vst [vmem:[#allocation2] sm:$0xff] %v1245
      %1247 = vst [vmem:[#allocation3] sm:$0xff] %v1243
      %v1248 = vpack.c.bf16 %v1245, %v1245
      %v1249 = vld [vmem:[%s9] sm:$0xf]
      %v1250 = vld [vmem:[%s9 + $0x4] sm:$0xf]
      %v1251 = vld [vmem:[%s9 + $0x8] sm:$0xf]
      %v1252 = vld [vmem:[%s9 + $0xc] sm:$0xf]
      %v1253 = vld [vmem:[%s9 + $0x10] sm:$0xf]
      %v1254 = vld [vmem:[%s9 + $0x14] sm:$0xf]
      %v1255 = vld [vmem:[%s9 + $0x18] sm:$0xf]
      %v1256 = vld [vmem:[%s9 + $0x1c] sm:$0xf]
      %v1257 = vld [vmem:[%s9 + $0x20] sm:$0xf]
      %v1258 = vld [vmem:[%s9 + $0x24] sm:$0xf]
      %v1259 = vld [vmem:[%s9 + $0x28] sm:$0xf]
      %v1260 = vld [vmem:[%s9 + $0x2c] sm:$0xf]
      %v1261 = vld [vmem:[%s9 + $0x30] sm:$0xf]
      %v1262 = vld [vmem:[%s9 + $0x34] sm:$0xf]
      %v1263 = vld [vmem:[%s9 + $0x38] sm:$0xf]
      %v1264 = vld [vmem:[%s9 + $0x3c] sm:$0xf]
      %v1265 = vld [vmem:[%s10] sm:$0xff]
      %v1282 = vunpack.c.l.b16 %v1249
      %v1283 = vunpack.c.l.b16 %v1250
      %v1284 = vunpack.c.l.b16 %v1251
      %v1285 = vunpack.c.l.b16 %v1252
      %v1286 = vunpack.c.l.b16 %v1253
      %v1287 = vunpack.c.l.b16 %v1254
      %v1288 = vunpack.c.l.b16 %v1255
      %v1289 = vunpack.c.l.b16 %v1256
      %v1290 = vunpack.c.l.b16 %v1257
      %v1291 = vunpack.c.l.b16 %v1258
      %v1292 = vunpack.c.l.b16 %v1259
      %v1293 = vunpack.c.l.b16 %v1260
      %v1294 = vunpack.c.l.b16 %v1261
      %v1295 = vunpack.c.l.b16 %v1262
      %v1296 = vunpack.c.l.b16 %v1263
      %v1297 = vunpack.c.l.b16 %v1264
      %v1298 = vpack.c.b16 %v1283, %v1282
      %v1299 = vpack.c.b16 %v1285, %v1284
      %v1300 = vpack.c.b16 %v1287, %v1286
      %v1301 = vpack.c.b16 %v1289, %v1288
      %v1302 = vpack.c.b16 %v1291, %v1290
      %v1303 = vpack.c.b16 %v1293, %v1292
      %v1304 = vpack.c.b16 %v1295, %v1294
      %v1305 = vpack.c.b16 %v1297, %v1296
      %1314 = vmatprep.subr.bf16.mxu0 0
      %1315 = vmatpush1.bf16.msra.mxu0 %v1298
      %1316 = vmatprep.subr.bf16.mxu0 0
      %1317 = vmatpush1.bf16.msra.mxu0 %v1299
      %1318 = vmatprep.subr.bf16.mxu0 0
      %1319 = vmatpush1.bf16.msra.mxu0 %v1300
      %1320 = vmatprep.subr.bf16.mxu0 0
      %1321 = vmatpush1.bf16.msra.mxu0 %v1301
      %1322 = vmatprep.subr.bf16.mxu0 0
      %1323 = vmatpush1.bf16.msra.mxu0 %v1302
      %1324 = vmatprep.subr.bf16.mxu0 0
      %1325 = vmatpush1.bf16.msra.mxu0 %v1303
      %1326 = vmatprep.subr.bf16.mxu0 0
      %1327 = vmatpush1.bf16.msra.mxu0 %v1304
      %1328 = vmatprep.subr.bf16.mxu0 0
      %1329 = vmatpush1.bf16.msra.mxu0 %v1305
      %1330 = vmatprep.subr.bf16.mxu0 0
      %1331 = vmatpush1.bf16.msra.mxu0 0
      %1332 = vmatprep.subr.bf16.mxu0 0
      %1333 = vmatpush1.bf16.msra.mxu0 0
      %1334 = vmatprep.subr.bf16.mxu0 0
      %1335 = vmatpush1.bf16.msra.mxu0 0
      %1336 = vmatprep.subr.bf16.mxu0 0
      %1337 = vmatpush1.bf16.msra.mxu0 0
      %1338 = vmatprep.subr.bf16.mxu0 0
      %1339 = vmatpush1.bf16.msra.mxu0 0
      %1340 = vmatprep.subr.bf16.mxu0 0
      %1341 = vmatpush1.bf16.msra.mxu0 0
      %1342 = vmatprep.subr.bf16.mxu0 0
      %1343 = vmatpush1.bf16.msra.mxu0 0
      %1344 = vmatprep.subr.bf16.mxu0 0
      %1345 = vmatpush1.bf16.msra.mxu0 0
      %1346 = vmatprep.mubr.bf16.mxu0 0
      %1347 = vmatmul.mubr.bf16.gmra.mrb[0].mxu0 %v1248
      %v1348 = vpop.f32.mrb[0].mxu0
      %v1349 = vadd.f32 %v1265, %v1348
      %v1350 = vpop.f32.mrb[0].mxu0
      %v1351 = vpop.f32.mrb[0].mxu0
      %v1352 = vpop.f32.mrb[0].mxu0
      %1353 = vdwg.mxu0
      %s1354 = smul.u32 %s656, 8
      %s1355 = scalar_lea.vmem %s12, %s1354
      %1356 = vst [vmem:[%s1355] sm:$0xff] %v1349
      %v1357 = vlaneseq
      %v1358 = vand.u32 %v1357, 127
      %1359 = vmax.xlane.f32.xlu0 %v1349
      %v1360 = vpop.xlane.xlu0 %1359
      %vm1361 = vcmp.eq.f32.partialorder %v1349, %v1360
      %v1362 = vsel %vm1361, %v1358, 128
      %v1363 = vand.u32 %v1362, 65535
      %v1364 = vshra.s32 %v1362, 16
      %v1365 = vcvt.s32.f32 %v1363
      %v1366 = vcvt.s32.f32 %v1364
      %1367 = vmin.xlane.f32.xlu0 %v1366
      %v1368 = vpop.xlane.xlu0 %1367
      %vm1369 = vcmp.eq.f32.partialorder %v1366, %v1368
      %v1370 = vsel %vm1369, %v1365, inf
      %1371 = vmin.xlane.f32.xlu0 %v1370
      %v1372 = vpop.xlane.xlu0 %1371
      %v1373 = vcvt.f32.s32 %v1372
      %v1374 = vcvt.f32.s32 %v1368
      %v1375 = vshll.u32 %v1374, 16
      %v1376 = vadd.s32 %v1375, %v1373
      %vm1377 = vcmp.eq.s32.totalorder %v1358, %v1376
      %v1378 = vsel %vm1377, 1, 0
      %v1379 = vcvt.s32.f32 %v1378
      %v1380 = vld [vmem:[%s11] sm:$0xff]
      %v1381 = vld [vmem:[%s11 + $0x8] sm:$0xff]
      %v1382 = vld [vmem:[%s11 + $0x10] sm:$0xff]
      %v1383 = vld [vmem:[%s11 + $0x18] sm:$0xff]
      %v1384 = vld [vmem:[%s11 + $0x20] sm:$0xff]
      %v1385 = vld [vmem:[%s11 + $0x28] sm:$0xff]
      %v1386 = vld [vmem:[%s11 + $0x30] sm:$0xff]
      %v1387 = vld [vmem:[%s11 + $0x38] sm:$0xff]
      %v1388 = vld [vmem:[%s11 + $0x40] sm:$0xff]
      %v1389 = vld [vmem:[%s11 + $0x48] sm:$0xff]
      %v1390 = vld [vmem:[%s11 + $0x50] sm:$0xff]
      %v1391 = vld [vmem:[%s11 + $0x58] sm:$0xff]
      %v1392 = vld [vmem:[%s11 + $0x60] sm:$0xff]
      %v1393 = vld [vmem:[%s11 + $0x68] sm:$0xff]
      %v1394 = vld [vmem:[%s11 + $0x70] sm:$0xff]
      %v1395 = vld [vmem:[%s11 + $0x78] sm:$0xff]
      %1396 = vmatprep.subr.mxu0 0.0
      %1397 = vmatpush1.msra.mxu0 %v1380
      %1398 = vmatprep.subr.mxu0 0.0
      %1399 = vmatpush1.msra.mxu0 %v1381
      %1400 = vmatprep.subr.mxu0 0.0
      %1401 = vmatpush1.msra.mxu0 %v1382
      %1402 = vmatprep.subr.mxu0 0.0
      %1403 = vmatpush1.msra.mxu0 %v1383
      %1404 = vmatprep.subr.mxu0 0.0
      %1405 = vmatpush1.msra.mxu0 %v1384
      %1406 = vmatprep.subr.mxu0 0.0
      %1407 = vmatpush1.msra.mxu0 %v1385
      %1408 = vmatprep.subr.mxu0 0.0
      %1409 = vmatpush1.msra.mxu0 %v1386
      %1410 = vmatprep.subr.mxu0 0.0
      %1411 = vmatpush1.msra.mxu0 %v1387
      %1412 = vmatprep.subr.mxu0 0.0
      %1413 = vmatpush1.msra.mxu0 %v1388
      %1414 = vmatprep.subr.mxu0 0.0
      %1415 = vmatpush1.msra.mxu0 %v1389
      %1416 = vmatprep.subr.mxu0 0.0
      %1417 = vmatpush1.msra.mxu0 %v1390
      %1418 = vmatprep.subr.mxu0 0.0
      %1419 = vmatpush1.msra.mxu0 %v1391
      %1420 = vmatprep.subr.mxu0 0.0
      %1421 = vmatpush1.msra.mxu0 %v1392
      %1422 = vmatprep.subr.mxu0 0.0
      %1423 = vmatpush1.msra.mxu0 %v1393
      %1424 = vmatprep.subr.mxu0 0.0
      %1425 = vmatpush1.msra.mxu0 %v1394
      %1426 = vmatprep.subr.mxu0 0.0
      %1427 = vmatpush1.msra.mxu0 %v1395
      %1428 = vmatprep.subr.mxu0 0.0
      %1429 = vmatpush1.msra.mxu0 0.0
      %1430 = vmatprep.subr.mxu0 0.0
      %1431 = vmatpush1.msra.mxu0 0.0
      %1432 = vmatprep.subr.mxu0 0.0
      %1433 = vmatpush1.msra.mxu0 0.0
      %1434 = vmatprep.subr.mxu0 0.0
      %1435 = vmatpush1.msra.mxu0 0.0
      %1436 = vmatprep.subr.mxu0 0.0
      %1437 = vmatpush1.msra.mxu0 0.0
      %1438 = vmatprep.subr.mxu0 0.0
      %1439 = vmatpush1.msra.mxu0 0.0
      %1440 = vmatprep.subr.mxu0 0.0
      %1441 = vmatpush1.msra.mxu0 0.0
      %1442 = vmatprep.subr.mxu0 0.0
      %1443 = vmatpush1.msra.mxu0 0.0
      %1444 = vmatprep.subr.mxu0 0.0
      %1445 = vmatpush1.msra.mxu0 0.0
      %1446 = vmatprep.subr.mxu0 0.0
      %1447 = vmatpush1.msra.mxu0 0.0
      %1448 = vmatprep.subr.mxu0 0.0
      %1449 = vmatpush1.msra.mxu0 0.0
      %1450 = vmatprep.subr.mxu0 0.0
      %1451 = vmatpush1.msra.mxu0 0.0
      %1452 = vmatprep.subr.mxu0 0.0
      %1453 = vmatpush1.msra.mxu0 0.0
      %1454 = vmatprep.subr.mxu0 0.0
      %1455 = vmatpush1.msra.mxu0 0.0
      %1456 = vmatprep.subr.mxu0 0.0
      %1457 = vmatpush1.msra.mxu0 0.0
      %1458 = vmatprep.subr.mxu0 0.0
      %1459 = vmatpush1.msra.mxu0 0.0
      %1460 = vmatprep.mubr.f32.mxu0 0.0
      %1461 = vmatmul.mubr.f32.gmra.mrb[0].mxu0 %v1379
      %v1462 = vpop.f32.mrb[0].mxu0
      %v1463 = vadd.f32 0.0, %v1462
      %v1464 = vpop.f32.mrb[0].mxu0
      %1465 = vdwg.mxu0
      %s1466 = sld [smem:[#allocation5 + %s656]]
      %p1467 = scmp.gt.s32.totalorder %s1466, 0
      %s1468 = scalar_select %p1467, 1, 0
      %s1469 = scvt.s32.f32 %s1468
      %s1470 = scalar_lea.vmem %s2, %s1354
      %v1471 = vld [vmem:[%s1470] sm:$0xff]
      %v1472 = vstv %s1469
      %v1473 = vmul.f32 %v1472, %v1471
      %s1474 = ssub.f32 1.0, %s1469
      %v1475 = vstv %s1474
      %v1476 = vmul.f32 %v1475, %v1463
      %v1477 = vadd.f32 %v1473, %v1476
      %1478 = vst [vmem:[#allocation4] sm:$0xff] %v1477
    $region65: #{seq2seq_forward.1} parent=1 // loop_footer
      %s660 = sadd.s32 1, %s656
    $region66: #{seq2seq_forward.1} parent=1 // loop_footer_branch
      %655 = sbr.rel target = $region62
    $region67: #{seq2seq_forward.1} parent=1 // loop_exit
      _
    // Predicated region
    $region68: #{seq2seq_forward.1} parent=1 // pred_check
      _
    $region69: #{seq2seq_forward.1} parent=1 // pred_check_branch
      %1480 = sbr.rel (0) target = $region71
    $region70: #{seq2seq_forward.1} parent=1 // pred_region
      _
    $region71: #{seq2seq_forward.1} parent=1 // pred_fallthru
      _
    // Predicated region
    $region72: #{seq2seq_forward.1} parent=1 // pred_check
      _
    $region73: #{seq2seq_forward.1} parent=1 // pred_check_branch
      %1482 = sbr.rel (0) target = $region75
    $region74: #{seq2seq_forward.1} parent=1 // pred_region
      _
    $region75: #{seq2seq_forward.1} parent=1 // pred_fallthru
      _
    %1483 = vsyncpa [#allocation6], 1

</llo_original>
